<compile_context>
chip_gen: v7x
topology: tpu7x:2x2x1
jax: 0.10.0
libtpu: 0.0.40
codegen_flags: <defaults>
</compile_context>

<pallas_src>
import jax
import jax.numpy as jnp
import numpy as np
from jax.experimental import pallas as pl
from jax.experimental.pallas import tpu as pltpu

# ----- small, module-consistent shapes -----
N = 2          # batch
CIN = 4        # numChannels
L = 32         # input sequence length
CLASSES = 3    # classes (number of per-MU sub-networks)
C1, C2, C3, C4, C5 = 128, 128, 128, 64, 256   # numNodes
K = 3          # conv kernel size

L1 = L - 2        # 30 after conv1
L2 = L1 - 2       # 28 after conv2
LP1 = L2 // 2     # 14 after maxpool1
L3 = LP1 - 2      # 12 after conv3
L4 = L3 - 2       # 10 after conv4
LP2 = L4 // 2     # 5  after maxpool2
FLAT = C4 * LP2   # 320 -> LazyLinear in_features


def sodcnn_kernel(x1_ref, w1_ref, b1_ref, w2_ref, b2_ref, w3_ref, b3_ref,
                  w4_ref, b4_ref, wf1_ref, bf1_ref, wf2_ref, bf2_ref, out_ref):
    """One grid step == one class sub-network; both batch rows fused in M."""

    def conv_relu(h, w_ref, b_ref):
        # im2col over the full (batch-stacked) time axis: pieces are 128-lane
        # aligned; windows straddling the batch boundary create junk rows that
        # are dropped later by the pooling compaction matmul.
        n = h.shape[0]
        a = jnp.concatenate([h[k:n - (K - 1) + k, :] for k in range(K)], axis=1)
        return jnp.maximum(
            jnp.dot(a, w_ref[0], preferred_element_type=jnp.float32) + b_ref[0],
            0.0)

    # conv1 (+ReLU): input im2col prepared by the wrapper -> (N*L1, K*CIN).
    h1 = jnp.maximum(
        jnp.dot(x1_ref[...], w1_ref[0], preferred_element_type=jnp.float32)
        + b1_ref[0], 0.0)                                # (60, 128)

    h2 = conv_relu(h1, w2_ref, b2_ref)                   # (58, 128); rows 28,29 junk

    # MaxPool1d(2,2): register-level pairwise max, then one MXU selection
    # matmul that compacts the valid (even-offset) rows and drops junk rows.
    m1 = jnp.maximum(h2[:-1, :], h2[1:, :])              # (57, 128)
    nr = m1.shape[0]
    r = jax.lax.broadcasted_iota(jnp.int32, (N * LP1, nr), 0)
    c = jax.lax.broadcasted_iota(jnp.int32, (N * LP1, nr), 1)
    # batch-0 pooled rows sit at 2r; batch-1 rows start K-1 later (junk gap).
    sel = jnp.where(c == 2 * r + jnp.where(r >= LP1, K - 1, 0), 1.0, 0.0)
    p1 = jnp.dot(sel.astype(jnp.float32), m1,
                 preferred_element_type=jnp.float32)     # (28, 128) compact
    # TODO(synk): Dropout(p=0.5) layers omitted -- identity in eval mode.

    h3 = conv_relu(p1, w3_ref, b3_ref)                   # (26, 128); rows 12,13 junk
    h4 = conv_relu(h3, w4_ref, b4_ref)                   # (24, 64);  rows 10..13 junk

    # MaxPool1d(2,2) + Flatten + fc1 fused: build one lane-dense (N, 320) block
    # whose (t, c) lane order matches the pre-permuted fc1 weight.
    m2 = jnp.maximum(h4[:-1, :], h4[1:, :])              # (23, 64)
    rows = []
    for b in range(N):
        base = b * LP1                                   # batch-1 valid rows start at 14
        rows.append(jnp.concatenate(
            [m2[base + 2 * t: base + 2 * t + 1, :] for t in range(LP2)], axis=1))
    flat = jnp.concatenate(rows, axis=0)                 # (N, 320)

    h5 = jnp.maximum(
        jnp.dot(flat, wf1_ref[0], preferred_element_type=jnp.float32)
        + bf1_ref[0], 0.0)                               # (N, 256)
    z = jnp.dot(h5, wf2_ref[0], preferred_element_type=jnp.float32) + bf2_ref[0]
    out_ref[0] = pl.reciprocal(1.0 + jnp.exp(-z), approx=True)   # Sigmoid, (N, 1)


def sodcnn_forward(x_ncl, kp):
    """x_ncl: (N, CIN, L) float32 (PyTorch NCL layout); kp: kernel-layout params."""
    x_nlc = jnp.transpose(x_ncl, (0, 2, 1))                      # (N, L, CIN)
    # conv1 im2col done host-side (pure layout prep, ~3 KB), batch-major rows.
    x1 = jnp.concatenate([x_nlc[:, k:k + L1, :] for k in range(K)],
                         axis=-1).reshape(N * L1, K * CIN)       # (60, 12)
    out = pl.pallas_call(
        sodcnn_kernel,
        out_shape=jax.ShapeDtypeStruct((CLASSES, N, 1), jnp.float32),
        grid=(CLASSES,),
        in_specs=[
            pl.BlockSpec((N * L1, K * CIN), lambda i: (0, 0)),
            pl.BlockSpec((1, K * CIN, C1), lambda i: (i, 0, 0)),
            pl.BlockSpec((1, 1, C1), lambda i: (i, 0, 0)),
            pl.BlockSpec((1, K * C1, C2), lambda i: (i, 0, 0)),
            pl.BlockSpec((1, 1, C2), lambda i: (i, 0, 0)),
            pl.BlockSpec((1, K * C2, C3), lambda i: (i, 0, 0)),
            pl.BlockSpec((1, 1, C3), lambda i: (i, 0, 0)),
            pl.BlockSpec((1, K * C3, C4), lambda i: (i, 0, 0)),
            pl.BlockSpec((1, 1, C4), lambda i: (i, 0, 0)),
            pl.BlockSpec((1, FLAT, C5), lambda i: (i, 0, 0)),
            pl.BlockSpec((1, 1, C5), lambda i: (i, 0, 0)),
            pl.BlockSpec((1, C5, 1), lambda i: (i, 0, 0)),
            pl.BlockSpec((1, 1, 1), lambda i: (i, 0, 0)),
        ],
        out_specs=pl.BlockSpec((1, N, 1), lambda i: (i, 0, 0)),
        compiler_params=pltpu.CompilerParams(
            dimension_semantics=("parallel",)),   # v7x: classes split across TCs
    )(x1, kp["w1"], kp["b1"], kp["w2"], kp["b2"], kp["w3"], kp["b3"],
      kp["w4"], kp["b4"], kp["wf1"], kp["bf1"], kp["wf2"], kp["bf2"])
    # (CLASSES, N, 1) -> (N, CLASSES)  == torch.cat(per-class outputs, dim=1)
    return out[:, :, 0].T


# ---------------- pure-JAX reference (PyTorch NCL semantics) ----------------
def _conv1d_ref(h, w, b):
    cout, cin, kk = w.shape
    lout = h.shape[-1] - kk + 1
    out = jnp.zeros((h.shape[0], cout, lout), jnp.float32) + b[None, :, None]
    for k in range(kk):
        out = out + jnp.einsum('ncl,oc->nol', h[:, :, k:k + lout], w[:, :, k],
                               precision=jax.lax.Precision.HIGHEST)
    return out


def _maxpool_ref(h):
    n, c, l = h.shape
    return h[:, :, :(l // 2) * 2].reshape(n, c, l // 2, 2).max(axis=-1)


def ref_forward(x_ncl, pt):
    outs = []
    for c in range(CLASSES):
        h = jnp.maximum(_conv1d_ref(x_ncl, pt["w1"][c], pt["b1"][c]), 0.0)
        h = jnp.maximum(_conv1d_ref(h, pt["w2"][c], pt["b2"][c]), 0.0)
        h = _maxpool_ref(h)
        h = jnp.maximum(_conv1d_ref(h, pt["w3"][c], pt["b3"][c]), 0.0)
        h = jnp.maximum(_conv1d_ref(h, pt["w4"][c], pt["b4"][c]), 0.0)
        h = _maxpool_ref(h)
        flat = h.reshape(h.shape[0], -1)            # torch Flatten: channel-major
        h = jnp.maximum(jnp.dot(flat, pt["wf1"][c].T,
                                precision=jax.lax.Precision.HIGHEST)
                        + pt["bf1"][c], 0.0)
        y = jax.nn.sigmoid(jnp.dot(h, pt["wf2"][c].T,
                                   precision=jax.lax.Precision.HIGHEST)
                           + pt["bf2"][c])
        outs.append(y)                               # (N, 1)
    return jnp.concatenate(outs, axis=1)             # (N, CLASSES)


def make_params(key):
    ks = jax.random.split(key, 12)
    s = 0.05
    # PyTorch-layout parameters (Conv1d: (Cout, Cin, K); Linear: (out, in)).
    pt = {
        "w1": s * jax.random.normal(ks[0], (CLASSES, C1, CIN, K), jnp.float32),
        "b1": s * jax.random.normal(ks[1], (CLASSES, C1), jnp.float32),
        "w2": s * jax.random.normal(ks[2], (CLASSES, C2, C1, K), jnp.float32),
        "b2": s * jax.random.normal(ks[3], (CLASSES, C2), jnp.float32),
        "w3": s * jax.random.normal(ks[4], (CLASSES, C3, C2, K), jnp.float32),
        "b3": s * jax.random.normal(ks[5], (CLASSES, C3), jnp.float32),
        "w4": s * jax.random.normal(ks[6], (CLASSES, C4, C3, K), jnp.float32),
        "b4": s * jax.random.normal(ks[7], (CLASSES, C4), jnp.float32),
        "wf1": s * jax.random.normal(ks[8], (CLASSES, C5, FLAT), jnp.float32),
        "bf1": s * jax.random.normal(ks[9], (CLASSES, C5), jnp.float32),
        "wf2": s * jax.random.normal(ks[10], (CLASSES, 1, C5), jnp.float32),
        "bf2": s * jax.random.normal(ks[11], (CLASSES, 1), jnp.float32),
    }
    # Kernel layout: conv weights im2col'd to (cls, K*Cin, Cout); fc1 permuted
    # to (cls, LP2*C4, C5) so the kernel's (t, c) flatten order reproduces
    # torch's channel-major Flatten; fc2 transposed to (cls, C5, 1).
    kp = {
        "w1": jnp.transpose(pt["w1"], (0, 3, 2, 1)).reshape(CLASSES, K * CIN, C1),
        "b1": pt["b1"].reshape(CLASSES, 1, C1),
        "w2": jnp.transpose(pt["w2"], (0, 3, 2, 1)).reshape(CLASSES, K * C1, C2),
        "b2": pt["b2"].reshape(CLASSES, 1, C2),
        "w3": jnp.transpose(pt["w3"], (0, 3, 2, 1)).reshape(CLASSES, K * C2, C3),
        "b3": pt["b3"].reshape(CLASSES, 1, C3),
        "w4": jnp.transpose(pt["w4"], (0, 3, 2, 1)).reshape(CLASSES, K * C3, C4),
        "b4": pt["b4"].reshape(CLASSES, 1, C4),
        "wf1": pt["wf1"].reshape(CLASSES, C5, C4, LP2)
                        .transpose(0, 3, 2, 1).reshape(CLASSES, FLAT, C5),
        "bf1": pt["bf1"].reshape(CLASSES, 1, C5),
        "wf2": jnp.transpose(pt["wf2"], (0, 2, 1)),
        "bf2": pt["bf2"].reshape(CLASSES, 1, 1),
    }
    return pt, kp


if __name__ == "__main__":
    key = jax.random.PRNGKey(0)
    kx, kw = jax.random.split(key)
    x_ncl = jax.random.normal(kx, (N, CIN, L), jnp.float32)   # PyTorch NCL input
    pt, kp = make_params(kw)

    out = jax.block_until_ready(sodcnn_forward(x_ncl, kp))    # (N, CLASSES)

    ref = jax.block_until_ready(ref_forward(x_ncl, pt))
    np.testing.assert_allclose(np.asarray(out), np.asarray(ref),
                               rtol=5e-2, atol=5e-2)
    print("KERNEL_OK")
</pallas_src>

<mosaic_0001>
module attributes {stable_mosaic.version = 11 : i64} {
  func.func @sodcnn_kernel(%arg0: i32, %arg1: memref<60x12xf32, #tpu.memory_space<vmem>>, %arg2: memref<1x12x128xf32, #tpu.memory_space<vmem>>, %arg3: memref<1x1x128xf32, #tpu.memory_space<vmem>>, %arg4: memref<1x384x128xf32, #tpu.memory_space<vmem>>, %arg5: memref<1x1x128xf32, #tpu.memory_space<vmem>>, %arg6: memref<1x384x128xf32, #tpu.memory_space<vmem>>, %arg7: memref<1x1x128xf32, #tpu.memory_space<vmem>>, %arg8: memref<1x384x64xf32, #tpu.memory_space<vmem>>, %arg9: memref<1x1x64xf32, #tpu.memory_space<vmem>>, %arg10: memref<1x320x256xf32, #tpu.memory_space<vmem>>, %arg11: memref<1x1x256xf32, #tpu.memory_space<vmem>>, %arg12: memref<1x256x1xf32, #tpu.memory_space<vmem>>, %arg13: memref<1x1x1xf32, #tpu.memory_space<vmem>>, %arg14: memref<1x2x1xf32, #tpu.memory_space<vmem>>) attributes {dimension_semantics = [#tpu.dimension_semantics<parallel>], iteration_bounds = array<i64: 3>, scalar_prefetch = 0 : i64, scratch_operands = 0 : i64, tpu.core_type = #tpu.core_type<tc>, window_params = [{pipeline_mode = #tpu.pipeline_mode<synchronous>, transform_indices = @transform_0, window_bounds = array<i64: 60, 12>}, {transform_indices = @transform_1, window_bounds = array<i64: 1, 12, 128>}, {transform_indices = @transform_2, window_bounds = array<i64: 1, 1, 128>}, {transform_indices = @transform_3, window_bounds = array<i64: 1, 384, 128>}, {transform_indices = @transform_4, window_bounds = array<i64: 1, 1, 128>}, {transform_indices = @transform_5, window_bounds = array<i64: 1, 384, 128>}, {transform_indices = @transform_6, window_bounds = array<i64: 1, 1, 128>}, {transform_indices = @transform_7, window_bounds = array<i64: 1, 384, 64>}, {transform_indices = @transform_8, window_bounds = array<i64: 1, 1, 64>}, {transform_indices = @transform_9, window_bounds = array<i64: 1, 320, 256>}, {transform_indices = @transform_10, window_bounds = array<i64: 1, 1, 256>}, {transform_indices = @transform_11, window_bounds = array<i64: 1, 256, 1>}, {transform_indices = @transform_12, window_bounds = array<i64: 1, 1, 1>}, {transform_indices = @transform_13, window_bounds = array<i64: 1, 2, 1>}]} {
    %c0 = arith.constant 0 : index
    %c0_0 = arith.constant 0 : index
    %0 = vector.load %arg1[%c0, %c0_0] : memref<60x12xf32, #tpu.memory_space<vmem>>, vector<60x12xf32>
    %c0_1 = arith.constant 0 : index
    %c0_2 = arith.constant 0 : index
    %c0_3 = arith.constant 0 : index
    %1 = vector.load %arg2[%c0_1, %c0_2, %c0_3] : memref<1x12x128xf32, #tpu.memory_space<vmem>>, vector<1x12x128xf32>
    %2 = vector.shape_cast %1 : vector<1x12x128xf32> to vector<12x128xf32>
    %cst = arith.constant dense<0.000000e+00> : vector<60x128xf32>
    %3 = tpu.matmul %0, %2, %cst {dimension_numbers = #tpu.dot_dimension_numbers<[1], [0], [0], [1], [0, 0, 1, 1], [], []>} : vector<60x12xf32>, vector<12x128xf32>, vector<60x128xf32> -> vector<60x128xf32>
    %c0_4 = arith.constant 0 : index
    %c0_5 = arith.constant 0 : index
    %c0_6 = arith.constant 0 : index
    %4 = vector.load %arg3[%c0_4, %c0_5, %c0_6] : memref<1x1x128xf32, #tpu.memory_space<vmem>>, vector<1x1x128xf32>
    %5 = vector.shape_cast %4 : vector<1x1x128xf32> to vector<1x128xf32>
    %6 = vector.broadcast %5 : vector<1x128xf32> to vector<60x128xf32>
    %7 = arith.addf %3, %6 : vector<60x128xf32>
    %cst_7 = arith.constant 0.000000e+00 : f32
    %8 = vector.broadcast %cst_7 : f32 to vector<60x128xf32>
    %9 = arith.maximumf %7, %8 : vector<60x128xf32>
    %10 = vector.extract_strided_slice %9 {offsets = [0, 0], sizes = [58, 128], strides = [1, 1]} : vector<60x128xf32> to vector<58x128xf32>
    %11 = vector.extract_strided_slice %9 {offsets = [1, 0], sizes = [58, 128], strides = [1, 1]} : vector<60x128xf32> to vector<58x128xf32>
    %12 = vector.extract_strided_slice %9 {offsets = [2, 0], sizes = [58, 128], strides = [1, 1]} : vector<60x128xf32> to vector<58x128xf32>
    %13 = tpu.concatenate %10, %11, %12 in 1 : vector<58x128xf32>, vector<58x128xf32>, vector<58x128xf32> -> vector<58x384xf32>
    %c0_8 = arith.constant 0 : index
    %c0_9 = arith.constant 0 : index
    %c0_10 = arith.constant 0 : index
    %14 = vector.load %arg4[%c0_8, %c0_9, %c0_10] : memref<1x384x128xf32, #tpu.memory_space<vmem>>, vector<1x384x128xf32>
    %15 = vector.shape_cast %14 : vector<1x384x128xf32> to vector<384x128xf32>
    %cst_11 = arith.constant dense<0.000000e+00> : vector<58x128xf32>
    %16 = tpu.matmul %13, %15, %cst_11 {dimension_numbers = #tpu.dot_dimension_numbers<[1], [0], [0], [1], [0, 0, 1, 1], [], []>} : vector<58x384xf32>, vector<384x128xf32>, vector<58x128xf32> -> vector<58x128xf32>
    %c0_12 = arith.constant 0 : index
    %c0_13 = arith.constant 0 : index
    %c0_14 = arith.constant 0 : index
    %17 = vector.load %arg5[%c0_12, %c0_13, %c0_14] : memref<1x1x128xf32, #tpu.memory_space<vmem>>, vector<1x1x128xf32>
    %18 = vector.shape_cast %17 : vector<1x1x128xf32> to vector<1x128xf32>
    %19 = vector.broadcast %18 : vector<1x128xf32> to vector<58x128xf32>
    %20 = arith.addf %16, %19 : vector<58x128xf32>
    %cst_15 = arith.constant 0.000000e+00 : f32
    %21 = vector.broadcast %cst_15 : f32 to vector<58x128xf32>
    %22 = arith.maximumf %20, %21 : vector<58x128xf32>
    %23 = vector.extract_strided_slice %22 {offsets = [0, 0], sizes = [57, 128], strides = [1, 1]} : vector<58x128xf32> to vector<57x128xf32>
    %24 = vector.extract_strided_slice %22 {offsets = [1, 0], sizes = [57, 128], strides = [1, 1]} : vector<58x128xf32> to vector<57x128xf32>
    %25 = arith.maximumf %23, %24 : vector<57x128xf32>
    %26 = tpu.iota {dimensions = array<i32: 0>} : vector<28x57xi32>
    %27 = tpu.iota {dimensions = array<i32: 1>} : vector<28x57xi32>
    %c2_i32 = arith.constant 2 : i32
    %28 = vector.broadcast %c2_i32 : i32 to vector<28x57xi32>
    %29 = arith.muli %28, %26 : vector<28x57xi32>
    %c14_i32 = arith.constant 14 : i32
    %30 = vector.broadcast %c14_i32 : i32 to vector<28x57xi32>
    %31 = arith.cmpi sge, %26, %30 : vector<28x57xi32>
    %c2_i32_16 = arith.constant 2 : i32
    %c0_i32 = arith.constant 0 : i32
    %32 = vector.broadcast %c2_i32_16 : i32 to vector<28x57xi32>
    %33 = vector.broadcast %c0_i32 : i32 to vector<28x57xi32>
    %34 = arith.select %31, %32, %33 : vector<28x57xi1>, vector<28x57xi32>
    %35 = arith.addi %29, %34 : vector<28x57xi32>
    %36 = arith.cmpi eq, %27, %35 : vector<28x57xi32>
    %cst_17 = arith.constant 1.000000e+00 : f32
    %cst_18 = arith.constant 0.000000e+00 : f32
    %37 = vector.broadcast %cst_17 : f32 to vector<28x57xf32>
    %38 = vector.broadcast %cst_18 : f32 to vector<28x57xf32>
    %39 = arith.select %36, %37, %38 : vector<28x57xi1>, vector<28x57xf32>
    %cst_19 = arith.constant dense<0.000000e+00> : vector<28x128xf32>
    %40 = tpu.matmul %39, %25, %cst_19 {dimension_numbers = #tpu.dot_dimension_numbers<[1], [0], [0], [1], [0, 0, 1, 1], [], []>} : vector<28x57xf32>, vector<57x128xf32>, vector<28x128xf32> -> vector<28x128xf32>
    %41 = vector.extract_strided_slice %40 {offsets = [0, 0], sizes = [26, 128], strides = [1, 1]} : vector<28x128xf32> to vector<26x128xf32>
    %42 = vector.extract_strided_slice %40 {offsets = [1, 0], sizes = [26, 128], strides = [1, 1]} : vector<28x128xf32> to vector<26x128xf32>
    %43 = vector.extract_strided_slice %40 {offsets = [2, 0], sizes = [26, 128], strides = [1, 1]} : vector<28x128xf32> to vector<26x128xf32>
    %44 = tpu.concatenate %41, %42, %43 in 1 : vector<26x128xf32>, vector<26x128xf32>, vector<26x128xf32> -> vector<26x384xf32>
    %c0_20 = arith.constant 0 : index
    %c0_21 = arith.constant 0 : index
    %c0_22 = arith.constant 0 : index
    %45 = vector.load %arg6[%c0_20, %c0_21, %c0_22] : memref<1x384x128xf32, #tpu.memory_space<vmem>>, vector<1x384x128xf32>
    %46 = vector.shape_cast %45 : vector<1x384x128xf32> to vector<384x128xf32>
    %cst_23 = arith.constant dense<0.000000e+00> : vector<26x128xf32>
    %47 = tpu.matmul %44, %46, %cst_23 {dimension_numbers = #tpu.dot_dimension_numbers<[1], [0], [0], [1], [0, 0, 1, 1], [], []>} : vector<26x384xf32>, vector<384x128xf32>, vector<26x128xf32> -> vector<26x128xf32>
    %c0_24 = arith.constant 0 : index
    %c0_25 = arith.constant 0 : index
    %c0_26 = arith.constant 0 : index
    %48 = vector.load %arg7[%c0_24, %c0_25, %c0_26] : memref<1x1x128xf32, #tpu.memory_space<vmem>>, vector<1x1x128xf32>
    %49 = vector.shape_cast %48 : vector<1x1x128xf32> to vector<1x128xf32>
    %50 = vector.broadcast %49 : vector<1x128xf32> to vector<26x128xf32>
    %51 = arith.addf %47, %50 : vector<26x128xf32>
    %cst_27 = arith.constant 0.000000e+00 : f32
    %52 = vector.broadcast %cst_27 : f32 to vector<26x128xf32>
    %53 = arith.maximumf %51, %52 : vector<26x128xf32>
    %54 = vector.extract_strided_slice %53 {offsets = [0, 0], sizes = [24, 128], strides = [1, 1]} : vector<26x128xf32> to vector<24x128xf32>
    %55 = vector.extract_strided_slice %53 {offsets = [1, 0], sizes = [24, 128], strides = [1, 1]} : vector<26x128xf32> to vector<24x128xf32>
    %56 = vector.extract_strided_slice %53 {offsets = [2, 0], sizes = [24, 128], strides = [1, 1]} : vector<26x128xf32> to vector<24x128xf32>
    %57 = tpu.concatenate %54, %55, %56 in 1 : vector<24x128xf32>, vector<24x128xf32>, vector<24x128xf32> -> vector<24x384xf32>
    %c0_28 = arith.constant 0 : index
    %c0_29 = arith.constant 0 : index
    %c0_30 = arith.constant 0 : index
    %58 = vector.load %arg8[%c0_28, %c0_29, %c0_30] : memref<1x384x64xf32, #tpu.memory_space<vmem>>, vector<1x384x64xf32>
    %59 = vector.shape_cast %58 : vector<1x384x64xf32> to vector<384x64xf32>
    %cst_31 = arith.constant dense<0.000000e+00> : vector<24x64xf32>
    %60 = tpu.matmul %57, %59, %cst_31 {dimension_numbers = #tpu.dot_dimension_numbers<[1], [0], [0], [1], [0, 0, 1, 1], [], []>} : vector<24x384xf32>, vector<384x64xf32>, vector<24x64xf32> -> vector<24x64xf32>
    %c0_32 = arith.constant 0 : index
    %c0_33 = arith.constant 0 : index
    %c0_34 = arith.constant 0 : index
    %61 = vector.load %arg9[%c0_32, %c0_33, %c0_34] : memref<1x1x64xf32, #tpu.memory_space<vmem>>, vector<1x1x64xf32>
    %62 = vector.shape_cast %61 : vector<1x1x64xf32> to vector<1x64xf32>
    %63 = vector.broadcast %62 : vector<1x64xf32> to vector<24x64xf32>
    %64 = arith.addf %60, %63 : vector<24x64xf32>
    %cst_35 = arith.constant 0.000000e+00 : f32
    %65 = vector.broadcast %cst_35 : f32 to vector<24x64xf32>
    %66 = arith.maximumf %64, %65 : vector<24x64xf32>
    %67 = vector.extract_strided_slice %66 {offsets = [0, 0], sizes = [23, 64], strides = [1, 1]} : vector<24x64xf32> to vector<23x64xf32>
    %68 = vector.extract_strided_slice %66 {offsets = [1, 0], sizes = [23, 64], strides = [1, 1]} : vector<24x64xf32> to vector<23x64xf32>
    %69 = arith.maximumf %67, %68 : vector<23x64xf32>
    %70 = vector.extract_strided_slice %69 {offsets = [0, 0], sizes = [1, 64], strides = [1, 1]} : vector<23x64xf32> to vector<1x64xf32>
    %71 = vector.extract_strided_slice %69 {offsets = [2, 0], sizes = [1, 64], strides = [1, 1]} : vector<23x64xf32> to vector<1x64xf32>
    %72 = vector.extract_strided_slice %69 {offsets = [4, 0], sizes = [1, 64], strides = [1, 1]} : vector<23x64xf32> to vector<1x64xf32>
    %73 = vector.extract_strided_slice %69 {offsets = [6, 0], sizes = [1, 64], strides = [1, 1]} : vector<23x64xf32> to vector<1x64xf32>
    %74 = vector.extract_strided_slice %69 {offsets = [8, 0], sizes = [1, 64], strides = [1, 1]} : vector<23x64xf32> to vector<1x64xf32>
    %75 = tpu.concatenate %70, %71, %72, %73, %74 in 1 : vector<1x64xf32>, vector<1x64xf32>, vector<1x64xf32>, vector<1x64xf32>, vector<1x64xf32> -> vector<1x320xf32>
    %76 = vector.extract_strided_slice %69 {offsets = [14, 0], sizes = [1, 64], strides = [1, 1]} : vector<23x64xf32> to vector<1x64xf32>
    %77 = vector.extract_strided_slice %69 {offsets = [16, 0], sizes = [1, 64], strides = [1, 1]} : vector<23x64xf32> to vector<1x64xf32>
    %78 = vector.extract_strided_slice %69 {offsets = [18, 0], sizes = [1, 64], strides = [1, 1]} : vector<23x64xf32> to vector<1x64xf32>
    %79 = vector.extract_strided_slice %69 {offsets = [20, 0], sizes = [1, 64], strides = [1, 1]} : vector<23x64xf32> to vector<1x64xf32>
    %80 = vector.extract_strided_slice %69 {offsets = [22, 0], sizes = [1, 64], strides = [1, 1]} : vector<23x64xf32> to vector<1x64xf32>
    %81 = tpu.concatenate %76, %77, %78, %79, %80 in 1 : vector<1x64xf32>, vector<1x64xf32>, vector<1x64xf32>, vector<1x64xf32>, vector<1x64xf32> -> vector<1x320xf32>
    %82 = tpu.concatenate %75, %81 in 0 : vector<1x320xf32>, vector<1x320xf32> -> vector<2x320xf32>
    %c0_36 = arith.constant 0 : index
    %c0_37 = arith.constant 0 : index
    %c0_38 = arith.constant 0 : index
    %83 = vector.load %arg10[%c0_36, %c0_37, %c0_38] : memref<1x320x256xf32, #tpu.memory_space<vmem>>, vector<1x320x256xf32>
    %84 = vector.shape_cast %83 : vector<1x320x256xf32> to vector<320x256xf32>
    %cst_39 = arith.constant dense<0.000000e+00> : vector<2x256xf32>
    %85 = tpu.matmul %82, %84, %cst_39 {dimension_numbers = #tpu.dot_dimension_numbers<[1], [0], [0], [1], [0, 0, 1, 1], [], []>} : vector<2x320xf32>, vector<320x256xf32>, vector<2x256xf32> -> vector<2x256xf32>
    %c0_40 = arith.constant 0 : index
    %c0_41 = arith.constant 0 : index
    %c0_42 = arith.constant 0 : index
    %86 = vector.load %arg11[%c0_40, %c0_41, %c0_42] : memref<1x1x256xf32, #tpu.memory_space<vmem>>, vector<1x1x256xf32>
    %87 = vector.shape_cast %86 : vector<1x1x256xf32> to vector<1x256xf32>
    %88 = vector.broadcast %87 : vector<1x256xf32> to vector<2x256xf32>
    %89 = arith.addf %85, %88 : vector<2x256xf32>
    %cst_43 = arith.constant 0.000000e+00 : f32
    %90 = vector.broadcast %cst_43 : f32 to vector<2x256xf32>
    %91 = arith.maximumf %89, %90 : vector<2x256xf32>
    %c0_44 = arith.constant 0 : index
    %c0_45 = arith.constant 0 : index
    %c0_46 = arith.constant 0 : index
    %92 = vector.load %arg12[%c0_44, %c0_45, %c0_46] : memref<1x256x1xf32, #tpu.memory_space<vmem>>, vector<1x256x1xf32>
    %93 = vector.shape_cast %92 : vector<1x256x1xf32> to vector<256x1xf32>
    %cst_47 = arith.constant dense<0.000000e+00> : vector<2x1xf32>
    %94 = tpu.matmul %91, %93, %cst_47 {dimension_numbers = #tpu.dot_dimension_numbers<[1], [0], [0], [1], [0, 0, 1, 1], [], []>} : vector<2x256xf32>, vector<256x1xf32>, vector<2x1xf32> -> vector<2x1xf32>
    %c0_48 = arith.constant 0 : index
    %c0_49 = arith.constant 0 : index
    %c0_50 = arith.constant 0 : index
    %95 = vector.load %arg13[%c0_48, %c0_49, %c0_50] : memref<1x1x1xf32, #tpu.memory_space<vmem>>, vector<1x1x1xf32>
    %96 = vector.shape_cast %95 : vector<1x1x1xf32> to vector<1x1xf32>
    %97 = vector.broadcast %96 : vector<1x1xf32> to vector<2x1xf32>
    %98 = arith.addf %94, %97 : vector<2x1xf32>
    %cst_51 = arith.constant 0.000000e+00 : f32
    %99 = vector.broadcast %cst_51 : f32 to vector<2x1xf32>
    %100 = arith.subf %99, %98 : vector<2x1xf32>
    %101 = math.exp %100 : vector<2x1xf32>
    %cst_52 = arith.constant 1.000000e+00 : f32
    %102 = vector.broadcast %cst_52 : f32 to vector<2x1xf32>
    %103 = arith.addf %102, %101 : vector<2x1xf32>
    %104 = tpu.reciprocal %103 {approx = true} : vector<2x1xf32> -> vector<2x1xf32>
    %c0_53 = arith.constant 0 : index
    %c0_54 = arith.constant 0 : index
    %c0_55 = arith.constant 0 : index
    %105 = vector.load %arg14[%c0_53, %c0_54, %c0_55] : memref<1x2x1xf32, #tpu.memory_space<vmem>>, vector<1x2x1xf32>
    %106 = vector.shape_cast %105 : vector<1x2x1xf32> to vector<2x1xf32>
    %107 = vector.shape_cast %104 : vector<2x1xf32> to vector<1x2x1xf32>
    tpu.vector_store %arg14[%c0_53, %c0_54, %c0_55], %107 {strides = array<i32>} : memref<1x2x1xf32, #tpu.memory_space<vmem>>, vector<1x2x1xf32>,
    return
  }
  func.func @transform_0(%arg0: i32) -> (i32, i32) {
    %c0_i32 = arith.constant 0 : i32
    %c0_i32_0 = arith.constant 0 : i32
    %c0_i32_1 = arith.constant 0 : i32
    return %c0_i32, %c0_i32_0 : i32, i32
  }
  func.func @transform_1(%arg0: i32) -> (i32, i32, i32) {
    %c0_i32 = arith.constant 0 : i32
    %c0_i32_0 = arith.constant 0 : i32
    %c0_i32_1 = arith.constant 0 : i32
    return %arg0, %c0_i32, %c0_i32_0 : i32, i32, i32
  }
  func.func @transform_2(%arg0: i32) -> (i32, i32, i32) {
    %c0_i32 = arith.constant 0 : i32
    %c0_i32_0 = arith.constant 0 : i32
    %c0_i32_1 = arith.constant 0 : i32
    return %arg0, %c0_i32, %c0_i32_0 : i32, i32, i32
  }
  func.func @transform_3(%arg0: i32) -> (i32, i32, i32) {
    %c0_i32 = arith.constant 0 : i32
    %c0_i32_0 = arith.constant 0 : i32
    %c0_i32_1 = arith.constant 0 : i32
    return %arg0, %c0_i32, %c0_i32_0 : i32, i32, i32
  }
  func.func @transform_4(%arg0: i32) -> (i32, i32, i32) {
    %c0_i32 = arith.constant 0 : i32
    %c0_i32_0 = arith.constant 0 : i32
    %c0_i32_1 = arith.constant 0 : i32
    return %arg0, %c0_i32, %c0_i32_0 : i32, i32, i32
  }
  func.func @transform_5(%arg0: i32) -> (i32, i32, i32) {
    %c0_i32 = arith.constant 0 : i32
    %c0_i32_0 = arith.constant 0 : i32
    %c0_i32_1 = arith.constant 0 : i32
    return %arg0, %c0_i32, %c0_i32_0 : i32, i32, i32
  }
  func.func @transform_6(%arg0: i32) -> (i32, i32, i32) {
    %c0_i32 = arith.constant 0 : i32
    %c0_i32_0 = arith.constant 0 : i32
    %c0_i32_1 = arith.constant 0 : i32
    return %arg0, %c0_i32, %c0_i32_0 : i32, i32, i32
  }
  func.func @transform_7(%arg0: i32) -> (i32, i32, i32) {
    %c0_i32 = arith.constant 0 : i32
    %c0_i32_0 = arith.constant 0 : i32
    %c0_i32_1 = arith.constant 0 : i32
    return %arg0, %c0_i32, %c0_i32_0 : i32, i32, i32
  }
  func.func @transform_8(%arg0: i32) -> (i32, i32, i32) {
    %c0_i32 = arith.constant 0 : i32
    %c0_i32_0 = arith.constant 0 : i32
    %c0_i32_1 = arith.constant 0 : i32
    return %arg0, %c0_i32, %c0_i32_0 : i32, i32, i32
  }
  func.func @transform_9(%arg0: i32) -> (i32, i32, i32) {
    %c0_i32 = arith.constant 0 : i32
    %c0_i32_0 = arith.constant 0 : i32
    %c0_i32_1 = arith.constant 0 : i32
    return %arg0, %c0_i32, %c0_i32_0 : i32, i32, i32
  }
  func.func @transform_10(%arg0: i32) -> (i32, i32, i32) {
    %c0_i32 = arith.constant 0 : i32
    %c0_i32_0 = arith.constant 0 : i32
    %c0_i32_1 = arith.constant 0 : i32
    return %arg0, %c0_i32, %c0_i32_0 : i32, i32, i32
  }
  func.func @transform_11(%arg0: i32) -> (i32, i32, i32) {
    %c0_i32 = arith.constant 0 : i32
    %c0_i32_0 = arith.constant 0 : i32
    %c0_i32_1 = arith.constant 0 : i32
    return %arg0, %c0_i32, %c0_i32_0 : i32, i32, i32
  }
  func.func @transform_12(%arg0: i32) -> (i32, i32, i32) {
    %c0_i32 = arith.constant 0 : i32
    %c0_i32_0 = arith.constant 0 : i32
    %c0_i32_1 = arith.constant 0 : i32
    return %arg0, %c0_i32, %c0_i32_0 : i32, i32, i32
  }
  func.func @transform_13(%arg0: i32) -> (i32, i32, i32) {
    %c0_i32 = arith.constant 0 : i32
    %c0_i32_0 = arith.constant 0 : i32
    %c0_i32_1 = arith.constant 0 : i32
    return %arg0, %c0_i32, %c0_i32_0 : i32, i32, i32
  }
}

</mosaic_0001>

<llo_original>
// kernel: tpu_custom_call.1
$region0: #{tpu_custom_call.1}
  #allocation0 [shape = 'u32[]', space=smem, size = 0x4, offset = 0x4, fixed_abs, tag = 'smem constant byte address 0x4 - core index']
  #allocation1 [shape = 'u32[144,128]{1,0:T(1,128)}', space=vmem, size = 0x12000, scoped, tag = 'internal scratch']
  %s0 = inlined_call_operand.vmem [shape: f32[60,12], index: 0, kind: input, shape index: {}]
  %s1 = inlined_call_operand.vmem [shape: f32[3,12,128], index: 1, kind: input, shape index: {}]
  %s2 = inlined_call_operand.vmem [shape: f32[3,1,128], index: 2, kind: input, shape index: {}]
  %s3 = inlined_call_operand.hbm [shape: f32[3,384,128], index: 3, kind: input, shape index: {}]
  %s4 = inlined_call_operand.vmem [shape: f32[3,1,128], index: 4, kind: input, shape index: {}]
  %s5 = inlined_call_operand.hbm [shape: f32[3,384,128], index: 5, kind: input, shape index: {}]
  %s6 = inlined_call_operand.vmem [shape: f32[3,1,128], index: 6, kind: input, shape index: {}]
  %s7 = inlined_call_operand.vmem [shape: f32[3,384,64], index: 7, kind: input, shape index: {}]
  %s8 = inlined_call_operand.vmem [shape: f32[3,1,64], index: 8, kind: input, shape index: {}]
  %s9 = inlined_call_operand.vmem [shape: f32[3,320,256], index: 9, kind: input, shape index: {}]
  %s10 = inlined_call_operand.vmem [shape: f32[3,1,256], index: 10, kind: input, shape index: {}]
  %s11 = inlined_call_operand.vmem [shape: f32[3,256,1], index: 11, kind: input, shape index: {}]
  %s12 = inlined_call_operand.vmem [shape: f32[3,1,1], index: 12, kind: input, shape index: {}]
  %s13 = inlined_call_operand.vmem [shape: f32[3,2,1], index: 13, kind: output, shape index: {}]
  %s14 = sld [smem:[#allocation0]]
  $region93: #{tpu_custom_call.1} parent=0
    _
  %s16 = ssub.s32 1, %s14
  %s17 = scalar_select 0, %s16, %s14
  $region1: #{tpu_custom_call.1} parent=0
    #allocation2 [shape = 'u8[393216]{0}', space=vmem, size = 0x60000, scoped, tag = 'input window, operand 3']
    #allocation3 [shape = 's32[2]{0}', space=sflag, size = 0x8, scoped, tag = 'scoped memory for tpu_custom_call.1']
    #allocation4 [shape = 'u8[393216]{0}', space=vmem, size = 0x60000, scoped, tag = 'input window, operand 5']
    #allocation5 [shape = 's32[2]{0}', space=sflag, size = 0x8, scoped, tag = 'scoped memory for tpu_custom_call.1']
    %18 = vsyncpa [#allocation3], 0
    %s19 = scalar_lea.sflag [#allocation3], 1
    %20 = vsyncpa %s19, 0
    %21 = vsyncpa [#allocation5], 0
    %s22 = scalar_lea.sflag [#allocation5], 1
    %23 = vsyncpa %s22, 0
    loop: start=0, step=1, limit=5
    $region2: #{tpu_custom_call.1} parent=1 // loop_pre_header
      _
    $region3: #{tpu_custom_call.1} parent=1 // loop_header
      %s25 = sphi 0, %s29
      %p26 = scmp.ge.s32.totalorder %s25, 5
      %s33 = sphi 0, %s33
      %s35 = sphi 0, %s33
      %s36 = sphi 0, %s35
      %s50 = sphi 0, %s36
      %s56 = sphi 0, %s58
      %s59 = sphi 0, %s56
      %s60 = sphi 0, %s59
      %s76 = sphi 0, %s60
      %s82 = sphi 0, %s84
      %s85 = sphi 0, %s82
      %s86 = sphi 0, %s85
      %s102 = sphi 0, %s86
      %s108 = sphi 0, %s110
      %s111 = sphi 0, %s108
      %s112 = sphi 0, %s111
      %s128 = sphi 0, %s112
      %s134 = sphi 0, %s136
      %s137 = sphi 0, %s134
      %s138 = sphi 0, %s137
      %s154 = sphi 0, %s138
      %s160 = sphi 0, %s162
      %s163 = sphi 0, %s160
      %s164 = sphi 0, %s163
      %s180 = sphi 0, %s164
      %s186 = sphi 0, %s188
      %s189 = sphi 0, %s186
      %s190 = sphi 0, %s189
      %s206 = sphi 0, %s190
      %s212 = sphi 0, %s214
      %s215 = sphi 0, %s212
      %s216 = sphi 0, %s215
      %s232 = sphi 0, %s216
      %s238 = sphi 0, %s240
      %s241 = sphi 0, %s238
      %s242 = sphi 0, %s241
      %s258 = sphi 0, %s242
      %s264 = sphi 0, %s266
      %s267 = sphi 0, %s264
      %s268 = sphi 0, %s267
      %s284 = sphi 0, %s268
      %s290 = sphi 0, %s292
      %s293 = sphi 0, %s290
      %s294 = sphi 0, %s293
      %s310 = sphi 0, %s294
      %s316 = sphi 0, %s318
      %s319 = sphi 0, %s316
      %s320 = sphi 0, %s319
      %s336 = sphi 0, %s320
      %s342 = sphi 0, %s344
      %s345 = sphi 0, %s342
      %s346 = sphi 0, %s345
      %s362 = sphi 0, %s346
      %s368 = sphi 0, %s370
      %s371 = sphi 0, %s368
      %s372 = sphi 0, %s371
      %s388 = sphi 0, %s372
    $region4: #{tpu_custom_call.1} parent=1 // loop_header_branch
      %28 = sbr.rel (%p26) target = $region8
    $region5: #{tpu_custom_call.1} parent=1 // loop_body
      %s30 = ssub.s32 %s25, 1
      %s31 = ssub.s32 %s25, 2
      %s32 = sadd.s32 %s25, 1
      %s34 = sadd.s32 %s33, 1
      %p37 = scmp.eq.s32.totalorder %s25, 2
      %p38 = scmp.ne.s32.totalorder %s33, %s35
      %p39 = scmp.eq.s32.totalorder %s25, 0
      %p40 = por %p38, %p39
      %p41 = scmp.ne.s32.totalorder %s33, %s35
      %p42 = scmp.eq.s32.totalorder %s30, 2
      %p43 = por %p41, %p42
      %p44 = scmp.ne.s32.totalorder %s35, %s36
      %p45 = scmp.eq.s32.totalorder %s30, 0
      %p46 = por %p44, %p45
      %p47 = scmp.ne.s32.totalorder %s35, %s36
      %p48 = scmp.eq.s32.totalorder %s31, 2
      %p49 = por %p47, %p48
      %p51 = scmp.ne.s32.totalorder %s36, %s50
      %p52 = scmp.eq.s32.totalorder %s31, 0
      %p53 = por %p51, %p52
      %s54 = ssub.s32 %s25, %s32
      %p55 = scmp.eq.s32.totalorder %s54, 0
      %s57 = sadd.s32 %s56, 1
      %s58 = scalar_select %p55, %s56, %s57
      %p61 = pneg %p55
      %p62 = scmp.eq.s32.totalorder %s25, 2
      %p63 = por %p61, %p62
      %p64 = scmp.ne.s32.totalorder %s56, %s59
      %p65 = scmp.eq.s32.totalorder %s25, 0
      %p66 = por %p64, %p65
      %p67 = scmp.ne.s32.totalorder %s56, %s59
      %p68 = scmp.eq.s32.totalorder %s30, 2
      %p69 = por %p67, %p68
      %p70 = scmp.ne.s32.totalorder %s59, %s60
      %p71 = scmp.eq.s32.totalorder %s30, 0
      %p72 = por %p70, %p71
      %p73 = scmp.ne.s32.totalorder %s59, %s60
      %p74 = scmp.eq.s32.totalorder %s31, 2
      %p75 = por %p73, %p74
      %p77 = scmp.ne.s32.totalorder %s60, %s76
      %p78 = scmp.eq.s32.totalorder %s31, 0
      %p79 = por %p77, %p78
      %s80 = ssub.s32 %s25, %s32
      %p81 = scmp.eq.s32.totalorder %s80, 0
      %s83 = sadd.s32 %s82, 1
      %s84 = scalar_select %p81, %s82, %s83
      %p87 = pneg %p81
      %p88 = scmp.eq.s32.totalorder %s25, 2
      %p89 = por %p87, %p88
      %p90 = scmp.ne.s32.totalorder %s82, %s85
      %p91 = scmp.eq.s32.totalorder %s25, 0
      %p92 = por %p90, %p91
      %p93 = scmp.ne.s32.totalorder %s82, %s85
      %p94 = scmp.eq.s32.totalorder %s30, 2
      %p95 = por %p93, %p94
      %p96 = scmp.ne.s32.totalorder %s85, %s86
      %p97 = scmp.eq.s32.totalorder %s30, 0
      %p98 = por %p96, %p97
      %p99 = scmp.ne.s32.totalorder %s85, %s86
      %p100 = scmp.eq.s32.totalorder %s31, 2
      %p101 = por %p99, %p100
      %p103 = scmp.ne.s32.totalorder %s86, %s102
      %p104 = scmp.eq.s32.totalorder %s31, 0
      %p105 = por %p103, %p104
      %s106 = ssub.s32 %s25, %s32
      %p107 = scmp.eq.s32.totalorder %s106, 0
      %s109 = sadd.s32 %s108, 1
      %s110 = scalar_select %p107, %s108, %s109
      %p113 = pneg %p107
      %p114 = scmp.eq.s32.totalorder %s25, 2
      %p115 = por %p113, %p114
      %p116 = scmp.ne.s32.totalorder %s108, %s111
      %p117 = scmp.eq.s32.totalorder %s25, 0
      %p118 = por %p116, %p117
      %p119 = scmp.ne.s32.totalorder %s108, %s111
      %p120 = scmp.eq.s32.totalorder %s30, 2
      %p121 = por %p119, %p120
      %p122 = scmp.ne.s32.totalorder %s111, %s112
      %p123 = scmp.eq.s32.totalorder %s30, 0
      %p124 = por %p122, %p123
      %p125 = scmp.ne.s32.totalorder %s111, %s112
      %p126 = scmp.eq.s32.totalorder %s31, 2
      %p127 = por %p125, %p126
      %p129 = scmp.ne.s32.totalorder %s112, %s128
      %p130 = scmp.eq.s32.totalorder %s31, 0
      %p131 = por %p129, %p130
      %s132 = ssub.s32 %s25, %s32
      %p133 = scmp.eq.s32.totalorder %s132, 0
      %s135 = sadd.s32 %s134, 1
      %s136 = scalar_select %p133, %s134, %s135
      %p139 = pneg %p133
      %p140 = scmp.eq.s32.totalorder %s25, 2
      %p141 = por %p139, %p140
      %p142 = scmp.ne.s32.totalorder %s134, %s137
      %p143 = scmp.eq.s32.totalorder %s25, 0
      %p144 = por %p142, %p143
      %p145 = scmp.ne.s32.totalorder %s134, %s137
      %p146 = scmp.eq.s32.totalorder %s30, 2
      %p147 = por %p145, %p146
      %p148 = scmp.ne.s32.totalorder %s137, %s138
      %p149 = scmp.eq.s32.totalorder %s30, 0
      %p150 = por %p148, %p149
      %p151 = scmp.ne.s32.totalorder %s137, %s138
      %p152 = scmp.eq.s32.totalorder %s31, 2
      %p153 = por %p151, %p152
      %p155 = scmp.ne.s32.totalorder %s138, %s154
      %p156 = scmp.eq.s32.totalorder %s31, 0
      %p157 = por %p155, %p156
      %s158 = ssub.s32 %s25, %s32
      %p159 = scmp.eq.s32.totalorder %s158, 0
      %s161 = sadd.s32 %s160, 1
      %s162 = scalar_select %p159, %s160, %s161
      %p165 = pneg %p159
      %p166 = scmp.eq.s32.totalorder %s25, 2
      %p167 = por %p165, %p166
      %p168 = scmp.ne.s32.totalorder %s160, %s163
      %p169 = scmp.eq.s32.totalorder %s25, 0
      %p170 = por %p168, %p169
      %p171 = scmp.ne.s32.totalorder %s160, %s163
      %p172 = scmp.eq.s32.totalorder %s30, 2
      %p173 = por %p171, %p172
      %p174 = scmp.ne.s32.totalorder %s163, %s164
      %p175 = scmp.eq.s32.totalorder %s30, 0
      %p176 = por %p174, %p175
      %p177 = scmp.ne.s32.totalorder %s163, %s164
      %p178 = scmp.eq.s32.totalorder %s31, 2
      %p179 = por %p177, %p178
      %p181 = scmp.ne.s32.totalorder %s164, %s180
      %p182 = scmp.eq.s32.totalorder %s31, 0
      %p183 = por %p181, %p182
      %s184 = ssub.s32 %s25, %s32
      %p185 = scmp.eq.s32.totalorder %s184, 0
      %s187 = sadd.s32 %s186, 1
      %s188 = scalar_select %p185, %s186, %s187
      %p191 = pneg %p185
      %p192 = scmp.eq.s32.totalorder %s25, 2
      %p193 = por %p191, %p192
      %p194 = scmp.ne.s32.totalorder %s186, %s189
      %p195 = scmp.eq.s32.totalorder %s25, 0
      %p196 = por %p194, %p195
      %p197 = scmp.ne.s32.totalorder %s186, %s189
      %p198 = scmp.eq.s32.totalorder %s30, 2
      %p199 = por %p197, %p198
      %p200 = scmp.ne.s32.totalorder %s189, %s190
      %p201 = scmp.eq.s32.totalorder %s30, 0
      %p202 = por %p200, %p201
      %p203 = scmp.ne.s32.totalorder %s189, %s190
      %p204 = scmp.eq.s32.totalorder %s31, 2
      %p205 = por %p203, %p204
      %p207 = scmp.ne.s32.totalorder %s190, %s206
      %p208 = scmp.eq.s32.totalorder %s31, 0
      %p209 = por %p207, %p208
      %s210 = ssub.s32 %s25, %s32
      %p211 = scmp.eq.s32.totalorder %s210, 0
      %s213 = sadd.s32 %s212, 1
      %s214 = scalar_select %p211, %s212, %s213
      %p217 = pneg %p211
      %p218 = scmp.eq.s32.totalorder %s25, 2
      %p219 = por %p217, %p218
      %p220 = scmp.ne.s32.totalorder %s212, %s215
      %p221 = scmp.eq.s32.totalorder %s25, 0
      %p222 = por %p220, %p221
      %p223 = scmp.ne.s32.totalorder %s212, %s215
      %p224 = scmp.eq.s32.totalorder %s30, 2
      %p225 = por %p223, %p224
      %p226 = scmp.ne.s32.totalorder %s215, %s216
      %p227 = scmp.eq.s32.totalorder %s30, 0
      %p228 = por %p226, %p227
      %p229 = scmp.ne.s32.totalorder %s215, %s216
      %p230 = scmp.eq.s32.totalorder %s31, 2
      %p231 = por %p229, %p230
      %p233 = scmp.ne.s32.totalorder %s216, %s232
      %p234 = scmp.eq.s32.totalorder %s31, 0
      %p235 = por %p233, %p234
      %s236 = ssub.s32 %s25, %s32
      %p237 = scmp.eq.s32.totalorder %s236, 0
      %s239 = sadd.s32 %s238, 1
      %s240 = scalar_select %p237, %s238, %s239
      %p243 = pneg %p237
      %p244 = scmp.eq.s32.totalorder %s25, 2
      %p245 = por %p243, %p244
      %p246 = scmp.ne.s32.totalorder %s238, %s241
      %p247 = scmp.eq.s32.totalorder %s25, 0
      %p248 = por %p246, %p247
      %p249 = scmp.ne.s32.totalorder %s238, %s241
      %p250 = scmp.eq.s32.totalorder %s30, 2
      %p251 = por %p249, %p250
      %p252 = scmp.ne.s32.totalorder %s241, %s242
      %p253 = scmp.eq.s32.totalorder %s30, 0
      %p254 = por %p252, %p253
      %p255 = scmp.ne.s32.totalorder %s241, %s242
      %p256 = scmp.eq.s32.totalorder %s31, 2
      %p257 = por %p255, %p256
      %p259 = scmp.ne.s32.totalorder %s242, %s258
      %p260 = scmp.eq.s32.totalorder %s31, 0
      %p261 = por %p259, %p260
      %s262 = ssub.s32 %s25, %s32
      %p263 = scmp.eq.s32.totalorder %s262, 0
      %s265 = sadd.s32 %s264, 1
      %s266 = scalar_select %p263, %s264, %s265
      %p269 = pneg %p263
      %p270 = scmp.eq.s32.totalorder %s25, 2
      %p271 = por %p269, %p270
      %p272 = scmp.ne.s32.totalorder %s264, %s267
      %p273 = scmp.eq.s32.totalorder %s25, 0
      %p274 = por %p272, %p273
      %p275 = scmp.ne.s32.totalorder %s264, %s267
      %p276 = scmp.eq.s32.totalorder %s30, 2
      %p277 = por %p275, %p276
      %p278 = scmp.ne.s32.totalorder %s267, %s268
      %p279 = scmp.eq.s32.totalorder %s30, 0
      %p280 = por %p278, %p279
      %p281 = scmp.ne.s32.totalorder %s267, %s268
      %p282 = scmp.eq.s32.totalorder %s31, 2
      %p283 = por %p281, %p282
      %p285 = scmp.ne.s32.totalorder %s268, %s284
      %p286 = scmp.eq.s32.totalorder %s31, 0
      %p287 = por %p285, %p286
      %s288 = ssub.s32 %s25, %s32
      %p289 = scmp.eq.s32.totalorder %s288, 0
      %s291 = sadd.s32 %s290, 1
      %s292 = scalar_select %p289, %s290, %s291
      %p295 = pneg %p289
      %p296 = scmp.eq.s32.totalorder %s25, 2
      %p297 = por %p295, %p296
      %p298 = scmp.ne.s32.totalorder %s290, %s293
      %p299 = scmp.eq.s32.totalorder %s25, 0
      %p300 = por %p298, %p299
      %p301 = scmp.ne.s32.totalorder %s290, %s293
      %p302 = scmp.eq.s32.totalorder %s30, 2
      %p303 = por %p301, %p302
      %p304 = scmp.ne.s32.totalorder %s293, %s294
      %p305 = scmp.eq.s32.totalorder %s30, 0
      %p306 = por %p304, %p305
      %p307 = scmp.ne.s32.totalorder %s293, %s294
      %p308 = scmp.eq.s32.totalorder %s31, 2
      %p309 = por %p307, %p308
      %p311 = scmp.ne.s32.totalorder %s294, %s310
      %p312 = scmp.eq.s32.totalorder %s31, 0
      %p313 = por %p311, %p312
      %s314 = ssub.s32 %s25, %s32
      %p315 = scmp.eq.s32.totalorder %s314, 0
      %s317 = sadd.s32 %s316, 1
      %s318 = scalar_select %p315, %s316, %s317
      %p321 = pneg %p315
      %p322 = scmp.eq.s32.totalorder %s25, 2
      %p323 = por %p321, %p322
      %p324 = scmp.ne.s32.totalorder %s316, %s319
      %p325 = scmp.eq.s32.totalorder %s25, 0
      %p326 = por %p324, %p325
      %p327 = scmp.ne.s32.totalorder %s316, %s319
      %p328 = scmp.eq.s32.totalorder %s30, 2
      %p329 = por %p327, %p328
      %p330 = scmp.ne.s32.totalorder %s319, %s320
      %p331 = scmp.eq.s32.totalorder %s30, 0
      %p332 = por %p330, %p331
      %p333 = scmp.ne.s32.totalorder %s319, %s320
      %p334 = scmp.eq.s32.totalorder %s31, 2
      %p335 = por %p333, %p334
      %p337 = scmp.ne.s32.totalorder %s320, %s336
      %p338 = scmp.eq.s32.totalorder %s31, 0
      %p339 = por %p337, %p338
      %s340 = ssub.s32 %s25, %s32
      %p341 = scmp.eq.s32.totalorder %s340, 0
      %s343 = sadd.s32 %s342, 1
      %s344 = scalar_select %p341, %s342, %s343
      %p347 = pneg %p341
      %p348 = scmp.eq.s32.totalorder %s25, 2
      %p349 = por %p347, %p348
      %p350 = scmp.ne.s32.totalorder %s342, %s345
      %p351 = scmp.eq.s32.totalorder %s25, 0
      %p352 = por %p350, %p351
      %p353 = scmp.ne.s32.totalorder %s342, %s345
      %p354 = scmp.eq.s32.totalorder %s30, 2
      %p355 = por %p353, %p354
      %p356 = scmp.ne.s32.totalorder %s345, %s346
      %p357 = scmp.eq.s32.totalorder %s30, 0
      %p358 = por %p356, %p357
      %p359 = scmp.ne.s32.totalorder %s345, %s346
      %p360 = scmp.eq.s32.totalorder %s31, 2
      %p361 = por %p359, %p360
      %p363 = scmp.ne.s32.totalorder %s346, %s362
      %p364 = scmp.eq.s32.totalorder %s31, 0
      %p365 = por %p363, %p364
      %s366 = ssub.s32 %s25, %s32
      %p367 = scmp.eq.s32.totalorder %s366, 0
      %s369 = sadd.s32 %s368, 1
      %s370 = scalar_select %p367, %s368, %s369
      %p373 = pneg %p367
      %p374 = scmp.eq.s32.totalorder %s25, 2
      %p375 = por %p373, %p374
      %p376 = scmp.ne.s32.totalorder %s368, %s371
      %p377 = scmp.eq.s32.totalorder %s25, 0
      %p378 = por %p376, %p377
      %p379 = scmp.ne.s32.totalorder %s368, %s371
      %p380 = scmp.eq.s32.totalorder %s30, 2
      %p381 = por %p379, %p380
      %p382 = scmp.ne.s32.totalorder %s371, %s372
      %p383 = scmp.eq.s32.totalorder %s30, 0
      %p384 = por %p382, %p383
      %p385 = scmp.ne.s32.totalorder %s371, %s372
      %p386 = scmp.eq.s32.totalorder %s31, 2
      %p387 = por %p385, %p386
      %p389 = scmp.ne.s32.totalorder %s372, %s388
      %p390 = scmp.eq.s32.totalorder %s31, 0
      %p391 = por %p389, %p390
      %p392 = scmp.le.s32.totalorder 1, %s25
      %p393 = scmp.lt.s32.totalorder %s25, 4
      %p394 = pnand %p392, %p393
      %p395 = pneg %p394
      // Predicated region
      $region9: #{tpu_custom_call.1} parent=5 // pred_check
        _
      $region10: #{tpu_custom_call.1} parent=5 // pred_check_branch
        %397 = sbr.rel (%p394) target = $region12
      $region11: #{tpu_custom_call.1} parent=5 // pred_region
        %s398 = ssub.s32 %s25, 1
        // Predicated region
        $region13: #{tpu_custom_call.1} parent=11 // pred_check
          %p399 = pneg %p46
        $region14: #{tpu_custom_call.1} parent=11 // pred_check_branch
          %401 = sbr.rel (%p399) target = $region16
        $region15: #{tpu_custom_call.1} parent=11 // pred_region
          _
        $region16: #{tpu_custom_call.1} parent=11 // pred_fallthru
          _
      $region12: #{tpu_custom_call.1} parent=5 // pred_fallthru
        _
      %p402 = scmp.lt.s32.totalorder %s25, 3
      // Predicated region
      $region17: #{tpu_custom_call.1} parent=5 // pred_check
        %p403 = pneg %p402
      $region18: #{tpu_custom_call.1} parent=5 // pred_check_branch
        %405 = sbr.rel (%p403) target = $region20
      $region19: #{tpu_custom_call.1} parent=5 // pred_region
        // Predicated region
        $region21: #{tpu_custom_call.1} parent=19 // pred_check
          %p406 = pneg %p66
        $region22: #{tpu_custom_call.1} parent=19 // pred_check_branch
          %408 = sbr.rel (%p406) target = $region24
        $region23: #{tpu_custom_call.1} parent=19 // pred_region
          %p409 = scmp.lt.s32.totalorder %s25, 2
          %s410 = scalar_select %p409, %s25, 2
          %s411 = smul.addr %s410, 2
          %s412 = smul.addr %s411, 8
          %s413 = scalar_lea.vmem %s1, %s412
        $region24: #{tpu_custom_call.1} parent=19 // pred_fallthru
          _
        // Predicated region
        $region25: #{tpu_custom_call.1} parent=19 // pred_check
          %p414 = pneg %p92
        $region26: #{tpu_custom_call.1} parent=19 // pred_check_branch
          %416 = sbr.rel (%p414) target = $region28
        $region27: #{tpu_custom_call.1} parent=19 // pred_region
          %p417 = scmp.lt.s32.totalorder %s25, 2
          %s418 = scalar_select %p417, %s25, 2
          %s419 = scalar_lea.vmem %s2, %s418
        $region28: #{tpu_custom_call.1} parent=19 // pred_fallthru
          _
        // Predicated region
        $region29: #{tpu_custom_call.1} parent=19 // pred_check
          %p420 = pneg %p118
        $region30: #{tpu_custom_call.1} parent=19 // pred_check_branch
          %422 = sbr.rel (%p420) target = $region32
        $region31: #{tpu_custom_call.1} parent=19 // pred_region
          %s423 = sand.u32 %s108, 1
          %s424 = scalar_lea.sflag [#allocation3], %s423
          %s425 = sand.u32 %s108, 1
          %s426 = smul.addr %s425, 384
          %s427 = scalar_lea.vmem [#allocation2], %s426
          %s429 = ssub.s32 6144, 6144
          %430 = vsyncadd %s424, %s429
          %s431 = smul.addr %s25, 48
          %s432 = smul.addr %s431, 128
          %s433 = scalar_lea.hbm %s3, %s432
          %s434 = sshll.u32 %s427, 4
          %s435 = int_to_ptr.vmem [resolvable:$true] %s434
          %440 = dma.hbm_to_vmem [thread:$0]  %s433, 6144, %s435, %s424, 128, 128, 8
        $region32: #{tpu_custom_call.1} parent=19 // pred_fallthru
          _
        // Predicated region
        $region33: #{tpu_custom_call.1} parent=19 // pred_check
          %p441 = pneg %p144
        $region34: #{tpu_custom_call.1} parent=19 // pred_check_branch
          %443 = sbr.rel (%p441) target = $region36
        $region35: #{tpu_custom_call.1} parent=19 // pred_region
          %p444 = scmp.lt.s32.totalorder %s25, 2
          %s445 = scalar_select %p444, %s25, 2
          %s446 = scalar_lea.vmem %s4, %s445
        $region36: #{tpu_custom_call.1} parent=19 // pred_fallthru
          _
        // Predicated region
        $region37: #{tpu_custom_call.1} parent=19 // pred_check
          %p447 = pneg %p170
        $region38: #{tpu_custom_call.1} parent=19 // pred_check_branch
          %449 = sbr.rel (%p447) target = $region40
        $region39: #{tpu_custom_call.1} parent=19 // pred_region
          %s450 = sand.u32 %s160, 1
          %s451 = scalar_lea.sflag [#allocation5], %s450
          %s452 = sand.u32 %s160, 1
          %s453 = smul.addr %s452, 384
          %s454 = scalar_lea.vmem [#allocation4], %s453
          %s456 = ssub.s32 6144, 6144
          %457 = vsyncadd %s451, %s456
          %s458 = smul.addr %s25, 48
          %s459 = smul.addr %s458, 128
          %s460 = scalar_lea.hbm %s5, %s459
          %s461 = sshll.u32 %s454, 4
          %s462 = int_to_ptr.vmem [resolvable:$true] %s461
          %467 = dma.hbm_to_vmem [thread:$0]  %s460, 6144, %s462, %s451, 128, 128, 8
        $region40: #{tpu_custom_call.1} parent=19 // pred_fallthru
          _
        // Predicated region
        $region41: #{tpu_custom_call.1} parent=19 // pred_check
          %p468 = pneg %p196
        $region42: #{tpu_custom_call.1} parent=19 // pred_check_branch
          %470 = sbr.rel (%p468) target = $region44
        $region43: #{tpu_custom_call.1} parent=19 // pred_region
          %p471 = scmp.lt.s32.totalorder %s25, 2
          %s472 = scalar_select %p471, %s25, 2
          %s473 = scalar_lea.vmem %s6, %s472
        $region44: #{tpu_custom_call.1} parent=19 // pred_fallthru
          _
        // Predicated region
        $region45: #{tpu_custom_call.1} parent=19 // pred_check
          %p474 = pneg %p222
        $region46: #{tpu_custom_call.1} parent=19 // pred_check_branch
          %476 = sbr.rel (%p474) target = $region48
        $region47: #{tpu_custom_call.1} parent=19 // pred_region
          %p477 = scmp.lt.s32.totalorder %s25, 2
          %s478 = scalar_select %p477, %s25, 2
          %s479 = smul.addr %s478, 48
          %s480 = smul.addr %s479, 8
          %s481 = scalar_lea.vmem %s7, %s480
        $region48: #{tpu_custom_call.1} parent=19 // pred_fallthru
          _
        // Predicated region
        $region49: #{tpu_custom_call.1} parent=19 // pred_check
          %p482 = pneg %p248
        $region50: #{tpu_custom_call.1} parent=19 // pred_check_branch
          %484 = sbr.rel (%p482) target = $region52
        $region51: #{tpu_custom_call.1} parent=19 // pred_region
          %p485 = scmp.lt.s32.totalorder %s25, 2
          %s486 = scalar_select %p485, %s25, 2
          %s487 = scalar_lea.vmem %s8, %s486
        $region52: #{tpu_custom_call.1} parent=19 // pred_fallthru
          _
        // Predicated region
        $region53: #{tpu_custom_call.1} parent=19 // pred_check
          %p488 = pneg %p274
        $region54: #{tpu_custom_call.1} parent=19 // pred_check_branch
          %490 = sbr.rel (%p488) target = $region56
        $region55: #{tpu_custom_call.1} parent=19 // pred_region
          %p491 = scmp.lt.s32.totalorder %s25, 2
          %s492 = scalar_select %p491, %s25, 2
          %s493 = smul.addr %s492, 80
          %s494 = smul.addr %s493, 8
          %s495 = scalar_lea.vmem %s9, %s494
        $region56: #{tpu_custom_call.1} parent=19 // pred_fallthru
          _
        // Predicated region
        $region57: #{tpu_custom_call.1} parent=19 // pred_check
          %p496 = pneg %p300
        $region58: #{tpu_custom_call.1} parent=19 // pred_check_branch
          %498 = sbr.rel (%p496) target = $region60
        $region59: #{tpu_custom_call.1} parent=19 // pred_region
          %p499 = scmp.lt.s32.totalorder %s25, 2
          %s500 = scalar_select %p499, %s25, 2
          %s501 = smul.addr %s500, 2
          %s502 = scalar_lea.vmem %s10, %s501
        $region60: #{tpu_custom_call.1} parent=19 // pred_fallthru
          _
        // Predicated region
        $region61: #{tpu_custom_call.1} parent=19 // pred_check
          %p503 = pneg %p326
        $region62: #{tpu_custom_call.1} parent=19 // pred_check_branch
          %505 = sbr.rel (%p503) target = $region64
        $region63: #{tpu_custom_call.1} parent=19 // pred_region
          %p506 = scmp.lt.s32.totalorder %s25, 2
          %s507 = scalar_select %p506, %s25, 2
          %s508 = smul.addr %s507, 32
          %s509 = smul.addr %s508, 8
          %s510 = scalar_lea.vmem %s11, %s509
        $region64: #{tpu_custom_call.1} parent=19 // pred_fallthru
          _
        // Predicated region
        $region65: #{tpu_custom_call.1} parent=19 // pred_check
          %p511 = pneg %p352
        $region66: #{tpu_custom_call.1} parent=19 // pred_check_branch
          %513 = sbr.rel (%p511) target = $region68
        $region67: #{tpu_custom_call.1} parent=19 // pred_region
          %p514 = scmp.lt.s32.totalorder %s25, 2
          %s515 = scalar_select %p514, %s25, 2
          %s516 = scalar_lea.vmem %s12, %s515
        $region68: #{tpu_custom_call.1} parent=19 // pred_fallthru
          _
      $region20: #{tpu_custom_call.1} parent=5 // pred_fallthru
        _
      %p517 = scmp.le.s32.totalorder 1, %s25
      %p518 = scmp.lt.s32.totalorder %s25, 4
      %p519 = pnand %p517, %p518
      %p520 = pneg %p519
      // Predicated region
      $region69: #{tpu_custom_call.1} parent=5 // pred_check
        _
      $region70: #{tpu_custom_call.1} parent=5 // pred_check_branch
        %522 = sbr.rel (%p519) target = $region72
      $region71: #{tpu_custom_call.1} parent=5 // pred_region
        %s523 = ssub.s32 %s25, 1
        %s524 = sand.u32 %s111, 1
        %s525 = scalar_lea.sflag [#allocation3], %s524
        %s526 = sand.u32 %s111, 1
        %s527 = smul.addr %s526, 384
        %s528 = scalar_lea.vmem [#allocation2], %s527
        // Predicated region
        $region73: #{tpu_custom_call.1} parent=71 // pred_check
          %p529 = pneg %p124
        $region74: #{tpu_custom_call.1} parent=71 // pred_check_branch
          %531 = sbr.rel (%p529) target = $region76
        $region75: #{tpu_custom_call.1} parent=71 // pred_region
          %532 = dma.done %s525, 6144
        $region76: #{tpu_custom_call.1} parent=71 // pred_fallthru
          _
        %s533 = sand.u32 %s163, 1
        %s534 = scalar_lea.sflag [#allocation5], %s533
        %s535 = sand.u32 %s163, 1
        %s536 = smul.addr %s535, 384
        %s537 = scalar_lea.vmem [#allocation4], %s536
        // Predicated region
        $region77: #{tpu_custom_call.1} parent=71 // pred_check
          %p538 = pneg %p176
        $region78: #{tpu_custom_call.1} parent=71 // pred_check_branch
          %540 = sbr.rel (%p538) target = $region80
        $region79: #{tpu_custom_call.1} parent=71 // pred_region
          %541 = dma.done %s534, 6144
        $region80: #{tpu_custom_call.1} parent=71 // pred_fallthru
          _
        %p542 = pneg %p46
        %p543 = pneg %p43
        %p544 = scmp.lt.s32.totalorder %s30, 2
        %s545 = scalar_select %p544, %s30, 2
        %s546 = smul.addr %s545, 2
        %s547 = smul.addr %s546, 8
        %s548 = scalar_lea.vmem %s1, %s547
        %p549 = pneg %p72
        %p550 = pneg %p69
        %p551 = scmp.lt.s32.totalorder %s30, 2
        %s552 = scalar_select %p551, %s30, 2
        %s553 = scalar_lea.vmem %s2, %s552
        %p554 = pneg %p98
        %p555 = pneg %p95
        %s556 = sand.u32 %s111, 1
        %s557 = scalar_lea.sflag [#allocation3], %s556
        %s558 = sand.u32 %s111, 1
        %s559 = smul.addr %s558, 384
        %s560 = scalar_lea.vmem [#allocation2], %s559
        %p561 = pneg %p124
        %p562 = pneg %p121
        %p563 = scmp.lt.s32.totalorder %s30, 2
        %s564 = scalar_select %p563, %s30, 2
        %s565 = scalar_lea.vmem %s4, %s564
        %p566 = pneg %p150
        %p567 = pneg %p147
        %s568 = sand.u32 %s163, 1
        %s569 = scalar_lea.sflag [#allocation5], %s568
        %s570 = sand.u32 %s163, 1
        %s571 = smul.addr %s570, 384
        %s572 = scalar_lea.vmem [#allocation4], %s571
        %p573 = pneg %p176
        %p574 = pneg %p173
        %p575 = scmp.lt.s32.totalorder %s30, 2
        %s576 = scalar_select %p575, %s30, 2
        %s577 = scalar_lea.vmem %s6, %s576
        %p578 = pneg %p202
        %p579 = pneg %p199
        %p580 = scmp.lt.s32.totalorder %s30, 2
        %s581 = scalar_select %p580, %s30, 2
        %s582 = smul.addr %s581, 48
        %s583 = smul.addr %s582, 8
        %s584 = scalar_lea.vmem %s7, %s583
        %p585 = pneg %p228
        %p586 = pneg %p225
        %p587 = scmp.lt.s32.totalorder %s30, 2
        %s588 = scalar_select %p587, %s30, 2
        %s589 = scalar_lea.vmem %s8, %s588
        %p590 = pneg %p254
        %p591 = pneg %p251
        %p592 = scmp.lt.s32.totalorder %s30, 2
        %s593 = scalar_select %p592, %s30, 2
        %s594 = smul.addr %s593, 80
        %s595 = smul.addr %s594, 8
        %s596 = scalar_lea.vmem %s9, %s595
        %p597 = pneg %p280
        %p598 = pneg %p277
        %p599 = scmp.lt.s32.totalorder %s30, 2
        %s600 = scalar_select %p599, %s30, 2
        %s601 = smul.addr %s600, 2
        %s602 = scalar_lea.vmem %s10, %s601
        %p603 = pneg %p306
        %p604 = pneg %p303
        %p605 = scmp.lt.s32.totalorder %s30, 2
        %s606 = scalar_select %p605, %s30, 2
        %s607 = smul.addr %s606, 32
        %s608 = smul.addr %s607, 8
        %s609 = scalar_lea.vmem %s11, %s608
        %p610 = pneg %p332
        %p611 = pneg %p329
        %p612 = scmp.lt.s32.totalorder %s30, 2
        %s613 = scalar_select %p612, %s30, 2
        %s614 = scalar_lea.vmem %s12, %s613
        %p615 = pneg %p358
        %p616 = pneg %p355
        %p617 = pneg %p384
        %p618 = pneg %p381
        %p619 = scmp.lt.s32.totalorder %s30, 2
        %s620 = scalar_select %p619, %s30, 2
        %s621 = smul.addr %s620, 2
        %s622 = scalar_lea.vmem %s13, %s621
        %p623 = scmp.lt.s32.totalorder %s30, 2
        %s624 = scalar_select %p623, %s30, 2
        %s625 = smul.addr %s624, 2
        %s626 = smul.addr %s625, 8
        %s627 = scalar_lea.vmem %s1, %s626
        %p628 = scmp.lt.s32.totalorder %s30, 2
        %s629 = scalar_select %p628, %s30, 2
        %s630 = scalar_lea.vmem %s2, %s629
        %p631 = scmp.lt.s32.totalorder %s30, 2
        %s632 = scalar_select %p631, %s30, 2
        %s633 = scalar_lea.vmem %s4, %s632
        %p634 = scmp.lt.s32.totalorder %s30, 2
        %s635 = scalar_select %p634, %s30, 2
        %s636 = scalar_lea.vmem %s6, %s635
        %p637 = scmp.lt.s32.totalorder %s30, 2
        %s638 = scalar_select %p637, %s30, 2
        %s639 = smul.addr %s638, 48
        %s640 = smul.addr %s639, 8
        %s641 = scalar_lea.vmem %s7, %s640
        %p642 = scmp.lt.s32.totalorder %s30, 2
        %s643 = scalar_select %p642, %s30, 2
        %s644 = scalar_lea.vmem %s8, %s643
        %p645 = scmp.lt.s32.totalorder %s30, 2
        %s646 = scalar_select %p645, %s30, 2
        %s647 = smul.addr %s646, 80
        %s648 = smul.addr %s647, 8
        %s649 = scalar_lea.vmem %s9, %s648
        %p650 = scmp.lt.s32.totalorder %s30, 2
        %s651 = scalar_select %p650, %s30, 2
        %s652 = smul.addr %s651, 2
        %s653 = scalar_lea.vmem %s10, %s652
        %p654 = scmp.lt.s32.totalorder %s30, 2
        %s655 = scalar_select %p654, %s30, 2
        %s656 = smul.addr %s655, 32
        %s657 = smul.addr %s656, 8
        %s658 = scalar_lea.vmem %s11, %s657
        %p659 = scmp.lt.s32.totalorder %s30, 2
        %s660 = scalar_select %p659, %s30, 2
        %s661 = scalar_lea.vmem %s12, %s660
        %p662 = scmp.lt.s32.totalorder %s30, 2
        %s663 = scalar_select %p662, %s30, 2
        %s664 = smul.addr %s663, 2
        %s665 = scalar_lea.vmem %s13, %s664
        %v666 = vld [vmem:[%s0] sm:$0xff]
        %v667 = vld [vmem:[%s0 + $0x8] sm:$0xff]
        %v668 = vld [vmem:[%s0 + $0x10] sm:$0xff]
        %v669 = vld [vmem:[%s0 + $0x18] sm:$0xff]
        %v670 = vld [vmem:[%s0 + $0x20] sm:$0xff]
        %v671 = vld [vmem:[%s0 + $0x28] sm:$0xff]
        %v672 = vld [vmem:[%s0 + $0x30] sm:$0xff]
        %v673 = vld [vmem:[%s0 + $0x38] sm:$0xf]
        %v674 = vld [vmem:[%s627] sm:$0xff]
        %v675 = vld [vmem:[%s627 + $0x8] sm:$0xf]
        %v676 = vld [vmem:[%s630] sm:$0x1]
        %v678 = vlaneseq
        %v679 = vshrl.u32 %v678, 7
        %v680 = vsub.s32 0, %v679
        %v681 = vrot.slane %v676, %v680
        %vm683 = vcmask 97280
        %v685 = vsel %vm683, %v666, 0
        %v688 = vsel %vm683, %v667, 0
        %v691 = vsel %vm683, %v668, 0
        %v694 = vsel %vm683, %v669, 0
        %v697 = vsel %vm683, %v670, 0
        %v700 = vsel %vm683, %v671, 0
        %v703 = vsel %vm683, %v672, 0
        %v706 = vsel %vm683, %v673, 0
        %vm708 = vcmask 1043456
        %v710 = vsel %vm708, %v675, 0
        %712 = vmatprep.subr.mxu0 0.0
        %713 = vmatpush1.msra.mxu0 %v674
        %714 = vmatprep.subr.mxu0 0.0
        %715 = vmatpush1.msra.mxu0 %v710
        %716 = vmatprep.subr.mxu0 0.0
        %717 = vmatpush1.msra.mxu0 0.0
        %718 = vmatprep.subr.mxu0 0.0
        %719 = vmatpush1.msra.mxu0 0.0
        %720 = vmatprep.subr.mxu0 0.0
        %721 = vmatpush1.msra.mxu0 0.0
        %722 = vmatprep.subr.mxu0 0.0
        %723 = vmatpush1.msra.mxu0 0.0
        %724 = vmatprep.subr.mxu0 0.0
        %725 = vmatpush1.msra.mxu0 0.0
        %726 = vmatprep.subr.mxu0 0.0
        %727 = vmatpush1.msra.mxu0 0.0
        %728 = vmatprep.subr.mxu0 0.0
        %729 = vmatpush1.msra.mxu0 0.0
        %730 = vmatprep.subr.mxu0 0.0
        %731 = vmatpush1.msra.mxu0 0.0
        %732 = vmatprep.subr.mxu0 0.0
        %733 = vmatpush1.msra.mxu0 0.0
        %734 = vmatprep.subr.mxu0 0.0
        %735 = vmatpush1.msra.mxu0 0.0
        %736 = vmatprep.subr.mxu0 0.0
        %737 = vmatpush1.msra.mxu0 0.0
        %738 = vmatprep.subr.mxu0 0.0
        %739 = vmatpush1.msra.mxu0 0.0
        %740 = vmatprep.subr.mxu0 0.0
        %741 = vmatpush1.msra.mxu0 0.0
        %742 = vmatprep.subr.mxu0 0.0
        %743 = vmatpush1.msra.mxu0 0.0
        %744 = vmatprep.subr.mxu0 0.0
        %745 = vmatpush1.msra.mxu0 0.0
        %746 = vmatprep.subr.mxu0 0.0
        %747 = vmatpush1.msra.mxu0 0.0
        %748 = vmatprep.subr.mxu0 0.0
        %749 = vmatpush1.msra.mxu0 0.0
        %750 = vmatprep.subr.mxu0 0.0
        %751 = vmatpush1.msra.mxu0 0.0
        %752 = vmatprep.subr.mxu0 0.0
        %753 = vmatpush1.msra.mxu0 0.0
        %754 = vmatprep.subr.mxu0 0.0
        %755 = vmatpush1.msra.mxu0 0.0
        %756 = vmatprep.subr.mxu0 0.0
        %757 = vmatpush1.msra.mxu0 0.0
        %758 = vmatprep.subr.mxu0 0.0
        %759 = vmatpush1.msra.mxu0 0.0
        %760 = vmatprep.subr.mxu0 0.0
        %761 = vmatpush1.msra.mxu0 0.0
        %762 = vmatprep.subr.mxu0 0.0
        %763 = vmatpush1.msra.mxu0 0.0
        %764 = vmatprep.subr.mxu0 0.0
        %765 = vmatpush1.msra.mxu0 0.0
        %766 = vmatprep.subr.mxu0 0.0
        %767 = vmatpush1.msra.mxu0 0.0
        %768 = vmatprep.subr.mxu0 0.0
        %769 = vmatpush1.msra.mxu0 0.0
        %770 = vmatprep.subr.mxu0 0.0
        %771 = vmatpush1.msra.mxu0 0.0
        %772 = vmatprep.subr.mxu0 0.0
        %773 = vmatpush1.msra.mxu0 0.0
        %774 = vmatprep.subr.mxu0 0.0
        %775 = vmatpush1.msra.mxu0 0.0
        %776 = vmatprep.mubr.f32.mxu0 0.0
        %777 = vmatmul.mubr.f32.gmra.mrb[0].mxu0 %v685
        %v778 = vpop.f32.mrb[0].mxu0
        %v779 = vadd.f32 %v681, %v778
        %v780 = vpop.f32.mrb[0].mxu0
        %781 = vmatprep.mubr.f32.mxu0 0.0
        %782 = vmatmul.mubr.f32.gmra.mrb[0].mxu0 %v688
        %v783 = vpop.f32.mrb[0].mxu0
        %v784 = vadd.f32 %v681, %v783
        %v785 = vpop.f32.mrb[0].mxu0
        %786 = vmatprep.mubr.f32.mxu0 0.0
        %787 = vmatmul.mubr.f32.gmra.mrb[0].mxu0 %v691
        %v788 = vpop.f32.mrb[0].mxu0
        %v789 = vadd.f32 %v681, %v788
        %v790 = vpop.f32.mrb[0].mxu0
        %791 = vmatprep.mubr.f32.mxu0 0.0
        %792 = vmatmul.mubr.f32.gmra.mrb[0].mxu0 %v694
        %v793 = vpop.f32.mrb[0].mxu0
        %v794 = vadd.f32 %v681, %v793
        %v795 = vpop.f32.mrb[0].mxu0
        %796 = vmatprep.mubr.f32.mxu0 0.0
        %797 = vmatmul.mubr.f32.gmra.mrb[0].mxu0 %v697
        %v798 = vpop.f32.mrb[0].mxu0
        %v799 = vadd.f32 %v681, %v798
        %v800 = vpop.f32.mrb[0].mxu0
        %801 = vmatprep.mubr.f32.mxu0 0.0
        %802 = vmatmul.mubr.f32.gmra.mrb[0].mxu0 %v700
        %v803 = vpop.f32.mrb[0].mxu0
        %v804 = vadd.f32 %v681, %v803
        %v805 = vpop.f32.mrb[0].mxu0
        %806 = vmatprep.mubr.f32.mxu0 0.0
        %807 = vmatmul.mubr.f32.gmra.mrb[0].mxu0 %v703
        %v808 = vpop.f32.mrb[0].mxu0
        %v809 = vadd.f32 %v681, %v808
        %v810 = vpop.f32.mrb[0].mxu0
        %811 = vmatprep.mubr.f32.mxu0 0.0
        %812 = vmatmul.mubr.f32.gmra.mrb[0].mxu0 %v706
        %v813 = vpop.f32.mrb[0].mxu0
        %v814 = vadd.f32 %v681, %v813
        %v815 = vpop.f32.mrb[0].mxu0
        %816 = vdwg.mxu0
        %v817 = vmax.f32 %v779, 0.0
        %v818 = vmax.f32 %v784, 0.0
        %v819 = vmax.f32 %v789, 0.0
        %v820 = vmax.f32 %v794, 0.0
        %v821 = vmax.f32 %v799, 0.0
        %v822 = vmax.f32 %v804, 0.0
        %v823 = vmax.f32 %v809, 0.0
        %v824 = vmax.f32 %v814, 0.0
        %vm833 = vcmask 1046528
        %v834 = vrot.slane %v817, 1
        %v835 = vrot.slane %v818, 1
        %v836 = vsel %vm833, %v834, %v835
        %v837 = vrot.slane %v819, 1
        %v838 = vsel %vm833, %v835, %v837
        %v839 = vrot.slane %v820, 1
        %v840 = vsel %vm833, %v837, %v839
        %v841 = vrot.slane %v821, 1
        %v842 = vsel %vm833, %v839, %v841
        %v843 = vrot.slane %v822, 1
        %v844 = vsel %vm833, %v841, %v843
        %v845 = vrot.slane %v823, 1
        %v846 = vsel %vm833, %v843, %v845
        %v847 = vrot.slane %v824, 1
        %v848 = vsel %vm833, %v845, %v847
        %vm857 = vcmask 1045504
        %v858 = vrot.slane %v817, 2
        %v859 = vrot.slane %v818, 2
        %v860 = vsel %vm857, %v858, %v859
        %v861 = vrot.slane %v819, 2
        %v862 = vsel %vm857, %v859, %v861
        %v863 = vrot.slane %v820, 2
        %v864 = vsel %vm857, %v861, %v863
        %v865 = vrot.slane %v821, 2
        %v866 = vsel %vm857, %v863, %v865
        %v867 = vrot.slane %v822, 2
        %v868 = vsel %vm857, %v865, %v867
        %v869 = vrot.slane %v823, 2
        %v870 = vsel %vm857, %v867, %v869
        %v871 = vrot.slane %v824, 2
        %v872 = vsel %vm857, %v869, %v871
        %v881 = vld [vmem:[%s528] sm:$0xff]
        %v882 = vld [vmem:[%s528 + $0x8] sm:$0xff]
        %v883 = vld [vmem:[%s528 + $0x10] sm:$0xff]
        %v884 = vld [vmem:[%s528 + $0x18] sm:$0xff]
        %v885 = vld [vmem:[%s528 + $0x20] sm:$0xff]
        %v886 = vld [vmem:[%s528 + $0x28] sm:$0xff]
        %v887 = vld [vmem:[%s528 + $0x30] sm:$0xff]
        %v888 = vld [vmem:[%s528 + $0x38] sm:$0xff]
        %v889 = vld [vmem:[%s528 + $0x40] sm:$0xff]
        %v890 = vld [vmem:[%s528 + $0x48] sm:$0xff]
        %v891 = vld [vmem:[%s528 + $0x50] sm:$0xff]
        %v892 = vld [vmem:[%s528 + $0x58] sm:$0xff]
        %v893 = vld [vmem:[%s528 + $0x60] sm:$0xff]
        %v894 = vld [vmem:[%s528 + $0x68] sm:$0xff]
        %v895 = vld [vmem:[%s528 + $0x70] sm:$0xff]
        %v896 = vld [vmem:[%s528 + $0x78] sm:$0xff]
        %v897 = vld [vmem:[%s528 + $0x80] sm:$0xff]
        %v898 = vld [vmem:[%s528 + $0x88] sm:$0xff]
        %v899 = vld [vmem:[%s528 + $0x90] sm:$0xff]
        %v900 = vld [vmem:[%s528 + $0x98] sm:$0xff]
        %v901 = vld [vmem:[%s528 + $0xa0] sm:$0xff]
        %v902 = vld [vmem:[%s528 + $0xa8] sm:$0xff]
        %v903 = vld [vmem:[%s528 + $0xb0] sm:$0xff]
        %v904 = vld [vmem:[%s528 + $0xb8] sm:$0xff]
        %v905 = vld [vmem:[%s528 + $0xc0] sm:$0xff]
        %v906 = vld [vmem:[%s528 + $0xc8] sm:$0xff]
        %v907 = vld [vmem:[%s528 + $0xd0] sm:$0xff]
        %v908 = vld [vmem:[%s528 + $0xd8] sm:$0xff]
        %v909 = vld [vmem:[%s528 + $0xe0] sm:$0xff]
        %v910 = vld [vmem:[%s528 + $0xe8] sm:$0xff]
        %v911 = vld [vmem:[%s528 + $0xf0] sm:$0xff]
        %v912 = vld [vmem:[%s528 + $0xf8] sm:$0xff]
        %v913 = vld [vmem:[%s528 + $0x100] sm:$0xff]
        %v914 = vld [vmem:[%s528 + $0x108] sm:$0xff]
        %v915 = vld [vmem:[%s528 + $0x110] sm:$0xff]
        %v916 = vld [vmem:[%s528 + $0x118] sm:$0xff]
        %v917 = vld [vmem:[%s528 + $0x120] sm:$0xff]
        %v918 = vld [vmem:[%s528 + $0x128] sm:$0xff]
        %v919 = vld [vmem:[%s528 + $0x130] sm:$0xff]
        %v920 = vld [vmem:[%s528 + $0x138] sm:$0xff]
        %v921 = vld [vmem:[%s528 + $0x140] sm:$0xff]
        %v922 = vld [vmem:[%s528 + $0x148] sm:$0xff]
        %v923 = vld [vmem:[%s528 + $0x150] sm:$0xff]
        %v924 = vld [vmem:[%s528 + $0x158] sm:$0xff]
        %v925 = vld [vmem:[%s528 + $0x160] sm:$0xff]
        %v926 = vld [vmem:[%s528 + $0x168] sm:$0xff]
        %v927 = vld [vmem:[%s528 + $0x170] sm:$0xff]
        %v928 = vld [vmem:[%s528 + $0x178] sm:$0xff]
        %v929 = vld [vmem:[%s633] sm:$0x1]
        %v931 = vlaneseq
        %v932 = vshrl.u32 %v931, 7
        %v933 = vsub.s32 0, %v932
        %v934 = vrot.slane %v929, %v933
        %936 = vmatprep.subr.mxu0 0.0
        %937 = vmatpush1.msra.mxu0 %v881
        %938 = vmatprep.subr.mxu0 0.0
        %939 = vmatpush1.msra.mxu0 %v882
        %940 = vmatprep.subr.mxu0 0.0
        %941 = vmatpush1.msra.mxu0 %v883
        %942 = vmatprep.subr.mxu0 0.0
        %943 = vmatpush1.msra.mxu0 %v884
        %944 = vmatprep.subr.mxu0 0.0
        %945 = vmatpush1.msra.mxu0 %v885
        %946 = vmatprep.subr.mxu0 0.0
        %947 = vmatpush1.msra.mxu0 %v886
        %948 = vmatprep.subr.mxu0 0.0
        %949 = vmatpush1.msra.mxu0 %v887
        %950 = vmatprep.subr.mxu0 0.0
        %951 = vmatpush1.msra.mxu0 %v888
        %952 = vmatprep.subr.mxu0 0.0
        %953 = vmatpush1.msra.mxu0 %v889
        %954 = vmatprep.subr.mxu0 0.0
        %955 = vmatpush1.msra.mxu0 %v890
        %956 = vmatprep.subr.mxu0 0.0
        %957 = vmatpush1.msra.mxu0 %v891
        %958 = vmatprep.subr.mxu0 0.0
        %959 = vmatpush1.msra.mxu0 %v892
        %960 = vmatprep.subr.mxu0 0.0
        %961 = vmatpush1.msra.mxu0 %v893
        %962 = vmatprep.subr.mxu0 0.0
        %963 = vmatpush1.msra.mxu0 %v894
        %964 = vmatprep.subr.mxu0 0.0
        %965 = vmatpush1.msra.mxu0 %v895
        %966 = vmatprep.subr.mxu0 0.0
        %967 = vmatpush1.msra.mxu0 %v896
        %968 = vmatprep.subr.mxu0 0.0
        %969 = vmatpush1.msra.mxu0 %v897
        %970 = vmatprep.subr.mxu0 0.0
        %971 = vmatpush1.msra.mxu0 %v898
        %972 = vmatprep.subr.mxu0 0.0
        %973 = vmatpush1.msra.mxu0 %v899
        %974 = vmatprep.subr.mxu0 0.0
        %975 = vmatpush1.msra.mxu0 %v900
        %976 = vmatprep.subr.mxu0 0.0
        %977 = vmatpush1.msra.mxu0 %v901
        %978 = vmatprep.subr.mxu0 0.0
        %979 = vmatpush1.msra.mxu0 %v902
        %980 = vmatprep.subr.mxu0 0.0
        %981 = vmatpush1.msra.mxu0 %v903
        %982 = vmatprep.subr.mxu0 0.0
        %983 = vmatpush1.msra.mxu0 %v904
        %984 = vmatprep.subr.mxu0 0.0
        %985 = vmatpush1.msra.mxu0 %v905
        %986 = vmatprep.subr.mxu0 0.0
        %987 = vmatpush1.msra.mxu0 %v906
        %988 = vmatprep.subr.mxu0 0.0
        %989 = vmatpush1.msra.mxu0 %v907
        %990 = vmatprep.subr.mxu0 0.0
        %991 = vmatpush1.msra.mxu0 %v908
        %992 = vmatprep.subr.mxu0 0.0
        %993 = vmatpush1.msra.mxu0 %v909
        %994 = vmatprep.subr.mxu0 0.0
        %995 = vmatpush1.msra.mxu0 %v910
        %996 = vmatprep.subr.mxu0 0.0
        %997 = vmatpush1.msra.mxu0 %v911
        %998 = vmatprep.subr.mxu0 0.0
        %999 = vmatpush1.msra.mxu0 %v912
        %1000 = vmatprep.mubr.f32.mxu0 %v836
        %1001 = vmatmul.mubr.f32.gmra.mrb[0].mxu0 %v817
        %v1002 = vpop.f32.mrb[0].mxu0
        %v1003 = vadd.f32 %v934, %v1002
        %v1004 = vpop.f32.mrb[0].mxu0
        %1005 = vmatprep.mubr.f32.mxu0 %v838
        %1006 = vmatmul.mubr.f32.gmra.mrb[0].mxu0 %v818
        %v1007 = vpop.f32.mrb[0].mxu0
        %v1008 = vadd.f32 %v934, %v1007
        %v1009 = vpop.f32.mrb[0].mxu0
        %1010 = vmatprep.mubr.f32.mxu0 %v840
        %1011 = vmatmul.mubr.f32.gmra.mrb[0].mxu0 %v819
        %v1012 = vpop.f32.mrb[0].mxu0
        %v1013 = vadd.f32 %v934, %v1012
        %v1014 = vpop.f32.mrb[0].mxu0
        %1015 = vmatprep.mubr.f32.mxu0 %v842
        %1016 = vmatmul.mubr.f32.gmra.mrb[0].mxu0 %v820
        %v1017 = vpop.f32.mrb[0].mxu0
        %v1018 = vadd.f32 %v934, %v1017
        %v1019 = vpop.f32.mrb[0].mxu0
        %1020 = vmatprep.mubr.f32.mxu0 %v844
        %1021 = vmatmul.mubr.f32.gmra.mrb[0].mxu0 %v821
        %v1022 = vpop.f32.mrb[0].mxu0
        %v1023 = vadd.f32 %v934, %v1022
        %v1024 = vpop.f32.mrb[0].mxu0
        %1025 = vmatprep.mubr.f32.mxu0 %v846
        %1026 = vmatmul.mubr.f32.gmra.mrb[0].mxu0 %v822
        %v1027 = vpop.f32.mrb[0].mxu0
        %v1028 = vadd.f32 %v934, %v1027
        %v1029 = vpop.f32.mrb[0].mxu0
        %1030 = vmatprep.mubr.f32.mxu0 %v848
        %1031 = vmatmul.mubr.f32.gmra.mrb[0].mxu0 %v823
        %v1032 = vpop.f32.mrb[0].mxu0
        %v1033 = vadd.f32 %v934, %v1032
        %v1034 = vpop.f32.mrb[0].mxu0
        %1035 = vmatprep.mubr.f32.mxu0 %v847
        %1036 = vmatmul.mubr.f32.gmra.mrb[0].mxu0 %v824
        %v1037 = vpop.f32.mrb[0].mxu0
        %v1038 = vadd.f32 %v934, %v1037
        %v1039 = vpop.f32.mrb[0].mxu0
        %1040 = vdwg.mxu0
        %1041 = vmatprep.subr.mxu0 0.0
        %1042 = vmatpush1.msra.mxu0 %v913
        %1043 = vmatprep.subr.mxu0 0.0
        %1044 = vmatpush1.msra.mxu0 %v914
        %1045 = vmatprep.subr.mxu0 0.0
        %1046 = vmatpush1.msra.mxu0 %v915
        %1047 = vmatprep.subr.mxu0 0.0
        %1048 = vmatpush1.msra.mxu0 %v916
        %1049 = vmatprep.subr.mxu0 0.0
        %1050 = vmatpush1.msra.mxu0 %v917
        %1051 = vmatprep.subr.mxu0 0.0
        %1052 = vmatpush1.msra.mxu0 %v918
        %1053 = vmatprep.subr.mxu0 0.0
        %1054 = vmatpush1.msra.mxu0 %v919
        %1055 = vmatprep.subr.mxu0 0.0
        %1056 = vmatpush1.msra.mxu0 %v920
        %1057 = vmatprep.subr.mxu0 0.0
        %1058 = vmatpush1.msra.mxu0 %v921
        %1059 = vmatprep.subr.mxu0 0.0
        %1060 = vmatpush1.msra.mxu0 %v922
        %1061 = vmatprep.subr.mxu0 0.0
        %1062 = vmatpush1.msra.mxu0 %v923
        %1063 = vmatprep.subr.mxu0 0.0
        %1064 = vmatpush1.msra.mxu0 %v924
        %1065 = vmatprep.subr.mxu0 0.0
        %1066 = vmatpush1.msra.mxu0 %v925
        %1067 = vmatprep.subr.mxu0 0.0
        %1068 = vmatpush1.msra.mxu0 %v926
        %1069 = vmatprep.subr.mxu0 0.0
        %1070 = vmatpush1.msra.mxu0 %v927
        %1071 = vmatprep.subr.mxu0 0.0
        %1072 = vmatpush1.msra.mxu0 %v928
        %1073 = vmatprep.subr.mxu0 0.0
        %1074 = vmatpush1.msra.mxu0 0.0
        %1075 = vmatprep.subr.mxu0 0.0
        %1076 = vmatpush1.msra.mxu0 0.0
        %1077 = vmatprep.subr.mxu0 0.0
        %1078 = vmatpush1.msra.mxu0 0.0
        %1079 = vmatprep.subr.mxu0 0.0
        %1080 = vmatpush1.msra.mxu0 0.0
        %1081 = vmatprep.subr.mxu0 0.0
        %1082 = vmatpush1.msra.mxu0 0.0
        %1083 = vmatprep.subr.mxu0 0.0
        %1084 = vmatpush1.msra.mxu0 0.0
        %1085 = vmatprep.subr.mxu0 0.0
        %1086 = vmatpush1.msra.mxu0 0.0
        %1087 = vmatprep.subr.mxu0 0.0
        %1088 = vmatpush1.msra.mxu0 0.0
        %1089 = vmatprep.subr.mxu0 0.0
        %1090 = vmatpush1.msra.mxu0 0.0
        %1091 = vmatprep.subr.mxu0 0.0
        %1092 = vmatpush1.msra.mxu0 0.0
        %1093 = vmatprep.subr.mxu0 0.0
        %1094 = vmatpush1.msra.mxu0 0.0
        %1095 = vmatprep.subr.mxu0 0.0
        %1096 = vmatpush1.msra.mxu0 0.0
        %1097 = vmatprep.subr.mxu0 0.0
        %1098 = vmatpush1.msra.mxu0 0.0
        %1099 = vmatprep.subr.mxu0 0.0
        %1100 = vmatpush1.msra.mxu0 0.0
        %1101 = vmatprep.subr.mxu0 0.0
        %1102 = vmatpush1.msra.mxu0 0.0
        %1103 = vmatprep.subr.mxu0 0.0
        %1104 = vmatpush1.msra.mxu0 0.0
        %1105 = vmatprep.mubr.f32.mxu0 0.0
        %1106 = vmatmul.mubr.f32.gmra.mrb[0].mxu0 %v860
        %v1107 = vpop.f32.mrb[0].mxu0
        %v1108 = vadd.f32 %v1003, %v1107
        %v1109 = vpop.f32.mrb[0].mxu0
        %1110 = vmatprep.mubr.f32.mxu0 0.0
        %1111 = vmatmul.mubr.f32.gmra.mrb[0].mxu0 %v862
        %v1112 = vpop.f32.mrb[0].mxu0
        %v1113 = vadd.f32 %v1008, %v1112
        %v1114 = vpop.f32.mrb[0].mxu0
        %1115 = vmatprep.mubr.f32.mxu0 0.0
        %1116 = vmatmul.mubr.f32.gmra.mrb[0].mxu0 %v864
        %v1117 = vpop.f32.mrb[0].mxu0
        %v1118 = vadd.f32 %v1013, %v1117
        %v1119 = vpop.f32.mrb[0].mxu0
        %1120 = vmatprep.mubr.f32.mxu0 0.0
        %1121 = vmatmul.mubr.f32.gmra.mrb[0].mxu0 %v866
        %v1122 = vpop.f32.mrb[0].mxu0
        %v1123 = vadd.f32 %v1018, %v1122
        %v1124 = vpop.f32.mrb[0].mxu0
        %1125 = vmatprep.mubr.f32.mxu0 0.0
        %1126 = vmatmul.mubr.f32.gmra.mrb[0].mxu0 %v868
        %v1127 = vpop.f32.mrb[0].mxu0
        %v1128 = vadd.f32 %v1023, %v1127
        %v1129 = vpop.f32.mrb[0].mxu0
        %1130 = vmatprep.mubr.f32.mxu0 0.0
        %1131 = vmatmul.mubr.f32.gmra.mrb[0].mxu0 %v870
        %v1132 = vpop.f32.mrb[0].mxu0
        %v1133 = vadd.f32 %v1028, %v1132
        %v1134 = vpop.f32.mrb[0].mxu0
        %1135 = vmatprep.mubr.f32.mxu0 0.0
        %1136 = vmatmul.mubr.f32.gmra.mrb[0].mxu0 %v872
        %v1137 = vpop.f32.mrb[0].mxu0
        %v1138 = vadd.f32 %v1033, %v1137
        %v1139 = vpop.f32.mrb[0].mxu0
        %1140 = vmatprep.mubr.f32.mxu0 0.0
        %1141 = vmatmul.mubr.f32.gmra.mrb[0].mxu0 %v871
        %v1142 = vpop.f32.mrb[0].mxu0
        %v1143 = vadd.f32 %v1038, %v1142
        %v1144 = vpop.f32.mrb[0].mxu0
        %1145 = vdwg.mxu0
        %v1146 = vmax.f32 %v1108, 0.0
        %v1147 = vmax.f32 %v1113, 0.0
        %v1148 = vmax.f32 %v1118, 0.0
        %v1149 = vmax.f32 %v1123, 0.0
        %v1150 = vmax.f32 %v1128, 0.0
        %v1151 = vmax.f32 %v1133, 0.0
        %v1152 = vmax.f32 %v1138, 0.0
        %v1153 = vmax.f32 %v1143, 0.0
        %v1162 = vrot.slane %v1146, 1
        %v1163 = vrot.slane %v1147, 1
        %v1164 = vsel %vm833, %v1162, %v1163
        %v1165 = vrot.slane %v1148, 1
        %v1166 = vsel %vm833, %v1163, %v1165
        %v1167 = vrot.slane %v1149, 1
        %v1168 = vsel %vm833, %v1165, %v1167
        %v1169 = vrot.slane %v1150, 1
        %v1170 = vsel %vm833, %v1167, %v1169
        %v1171 = vrot.slane %v1151, 1
        %v1172 = vsel %vm833, %v1169, %v1171
        %v1173 = vrot.slane %v1152, 1
        %v1174 = vsel %vm833, %v1171, %v1173
        %v1175 = vrot.slane %v1153, 1
        %v1176 = vsel %vm833, %v1173, %v1175
        %v1185 = vmax.f32 %v1146, %v1164
        %v1186 = vmax.f32 %v1147, %v1166
        %v1187 = vmax.f32 %v1148, %v1168
        %v1188 = vmax.f32 %v1149, %v1170
        %v1189 = vmax.f32 %v1150, %v1172
        %v1190 = vmax.f32 %v1151, %v1174
        %v1191 = vmax.f32 %v1152, %v1176
        %v1192 = vmax.f32 %v1153, %v1175
        %v1193 = vlaneseq
        %v1194 = vshrl.u32 %v1193, 7
        %v1195 = vadd.s32 %v1194, 8
        %v1196 = vadd.s32 %v1194, 16
        %v1197 = vadd.s32 %v1194, 24
        %v1198 = vlaneseq
        %v1199 = vand.u32 %v1198, 127
        %v1200 = vmul.u32 %v1194, 2
        %v1201 = vmul.u32 %v1195, 2
        %v1202 = vmul.u32 %v1196, 2
        %v1203 = vmul.u32 %v1197, 2
        %vm1204 = vcmp.ge.s32.totalorder %v1194, 14
        %vm1205 = vcmp.ge.s32.totalorder %v1195, 14
        %vm1206 = vcmp.ge.s32.totalorder %v1196, 14
        %vm1207 = vcmp.ge.s32.totalorder %v1197, 14
        %v1208 = vsel %vm1204, 2, 0
        %v1209 = vsel %vm1205, 2, 0
        %v1210 = vsel %vm1206, 2, 0
        %v1211 = vsel %vm1207, 2, 0
        %v1212 = vadd.s32 %v1200, %v1208
        %v1213 = vadd.s32 %v1201, %v1209
        %v1214 = vadd.s32 %v1202, %v1210
        %v1215 = vadd.s32 %v1203, %v1211
        %vm1216 = vcmp.eq.s32.totalorder %v1199, %v1212
        %vm1217 = vcmp.eq.s32.totalorder %v1199, %v1213
        %vm1218 = vcmp.eq.s32.totalorder %v1199, %v1214
        %vm1219 = vcmp.eq.s32.totalorder %v1199, %v1215
        %v1220 = vsel %vm1216, 1.0, 0.0
        %v1221 = vsel %vm1217, 1.0, 0.0
        %v1222 = vsel %vm1218, 1.0, 0.0
        %v1223 = vsel %vm1219, 1.0, 0.0
        %vm1224 = vcmask 465920
        %v1226 = vsel %vm1224, %v1220, 0
        %v1229 = vsel %vm1224, %v1221, 0
        %v1232 = vsel %vm1224, %v1222, 0
        %v1235 = vsel %vm1224, %v1223, 0
        %vm1237 = vcmask 1040384
        %v1239 = vsel %vm1237, %v1192, 0
        %1241 = vmatprep.subr.mxu0 0.0
        %1242 = vmatpush1.msra.mxu0 %v1185
        %1243 = vmatprep.subr.mxu0 0.0
        %1244 = vmatpush1.msra.mxu0 %v1186
        %1245 = vmatprep.subr.mxu0 0.0
        %1246 = vmatpush1.msra.mxu0 %v1187
        %1247 = vmatprep.subr.mxu0 0.0
        %1248 = vmatpush1.msra.mxu0 %v1188
        %1249 = vmatprep.subr.mxu0 0.0
        %1250 = vmatpush1.msra.mxu0 %v1189
        %1251 = vmatprep.subr.mxu0 0.0
        %1252 = vmatpush1.msra.mxu0 %v1190
        %1253 = vmatprep.subr.mxu0 0.0
        %1254 = vmatpush1.msra.mxu0 %v1191
        %1255 = vmatprep.subr.mxu0 0.0
        %1256 = vmatpush1.msra.mxu0 %v1239
        %1257 = vmatprep.subr.mxu0 0.0
        %1258 = vmatpush1.msra.mxu0 0.0
        %1259 = vmatprep.subr.mxu0 0.0
        %1260 = vmatpush1.msra.mxu0 0.0
        %1261 = vmatprep.subr.mxu0 0.0
        %1262 = vmatpush1.msra.mxu0 0.0
        %1263 = vmatprep.subr.mxu0 0.0
        %1264 = vmatpush1.msra.mxu0 0.0
        %1265 = vmatprep.subr.mxu0 0.0
        %1266 = vmatpush1.msra.mxu0 0.0
        %1267 = vmatprep.subr.mxu0 0.0
        %1268 = vmatpush1.msra.mxu0 0.0
        %1269 = vmatprep.subr.mxu0 0.0
        %1270 = vmatpush1.msra.mxu0 0.0
        %1271 = vmatprep.subr.mxu0 0.0
        %1272 = vmatpush1.msra.mxu0 0.0
        %1273 = vmatprep.subr.mxu0 0.0
        %1274 = vmatpush1.msra.mxu0 0.0
        %1275 = vmatprep.subr.mxu0 0.0
        %1276 = vmatpush1.msra.mxu0 0.0
        %1277 = vmatprep.subr.mxu0 0.0
        %1278 = vmatpush1.msra.mxu0 0.0
        %1279 = vmatprep.subr.mxu0 0.0
        %1280 = vmatpush1.msra.mxu0 0.0
        %1281 = vmatprep.subr.mxu0 0.0
        %1282 = vmatpush1.msra.mxu0 0.0
        %1283 = vmatprep.subr.mxu0 0.0
        %1284 = vmatpush1.msra.mxu0 0.0
        %1285 = vmatprep.subr.mxu0 0.0
        %1286 = vmatpush1.msra.mxu0 0.0
        %1287 = vmatprep.subr.mxu0 0.0
        %1288 = vmatpush1.msra.mxu0 0.0
        %1289 = vmatprep.subr.mxu0 0.0
        %1290 = vmatpush1.msra.mxu0 0.0
        %1291 = vmatprep.subr.mxu0 0.0
        %1292 = vmatpush1.msra.mxu0 0.0
        %1293 = vmatprep.subr.mxu0 0.0
        %1294 = vmatpush1.msra.mxu0 0.0
        %1295 = vmatprep.subr.mxu0 0.0
        %1296 = vmatpush1.msra.mxu0 0.0
        %1297 = vmatprep.subr.mxu0 0.0
        %1298 = vmatpush1.msra.mxu0 0.0
        %1299 = vmatprep.subr.mxu0 0.0
        %1300 = vmatpush1.msra.mxu0 0.0
        %1301 = vmatprep.subr.mxu0 0.0
        %1302 = vmatpush1.msra.mxu0 0.0
        %1303 = vmatprep.subr.mxu0 0.0
        %1304 = vmatpush1.msra.mxu0 0.0
        %1305 = vmatprep.mubr.f32.mxu0 0.0
        %1306 = vmatmul.mubr.f32.gmra.mrb[0].mxu0 %v1226
        %v1307 = vpop.f32.mrb[0].mxu0
        %v1308 = vadd.f32 0.0, %v1307
        %v1309 = vpop.f32.mrb[0].mxu0
        %1310 = vmatprep.mubr.f32.mxu0 0.0
        %1311 = vmatmul.mubr.f32.gmra.mrb[0].mxu0 %v1229
        %v1312 = vpop.f32.mrb[0].mxu0
        %v1313 = vadd.f32 0.0, %v1312
        %v1314 = vpop.f32.mrb[0].mxu0
        %1315 = vmatprep.mubr.f32.mxu0 0.0
        %1316 = vmatmul.mubr.f32.gmra.mrb[0].mxu0 %v1232
        %v1317 = vpop.f32.mrb[0].mxu0
        %v1318 = vadd.f32 0.0, %v1317
        %v1319 = vpop.f32.mrb[0].mxu0
        %1320 = vmatprep.mubr.f32.mxu0 0.0
        %1321 = vmatmul.mubr.f32.gmra.mrb[0].mxu0 %v1235
        %v1322 = vpop.f32.mrb[0].mxu0
        %v1323 = vadd.f32 0.0, %v1322
        %v1324 = vpop.f32.mrb[0].mxu0
        %1325 = vdwg.mxu0
        %v1330 = vrot.slane %v1308, 1
        %v1331 = vrot.slane %v1313, 1
        %v1332 = vsel %vm833, %v1330, %v1331
        %v1333 = vrot.slane %v1318, 1
        %v1334 = vsel %vm833, %v1331, %v1333
        %v1335 = vrot.slane %v1323, 1
        %v1336 = vsel %vm833, %v1333, %v1335
        %v1341 = vrot.slane %v1308, 2
        %v1342 = vrot.slane %v1313, 2
        %v1343 = vsel %vm857, %v1341, %v1342
        %v1344 = vrot.slane %v1318, 2
        %v1345 = vsel %vm857, %v1342, %v1344
        %v1346 = vrot.slane %v1323, 2
        %v1347 = vsel %vm857, %v1344, %v1346
        %v1352 = vld [vmem:[%s537] sm:$0xff]
        %v1353 = vld [vmem:[%s537 + $0x8] sm:$0xff]
        %v1354 = vld [vmem:[%s537 + $0x10] sm:$0xff]
        %v1355 = vld [vmem:[%s537 + $0x18] sm:$0xff]
        %v1356 = vld [vmem:[%s537 + $0x20] sm:$0xff]
        %v1357 = vld [vmem:[%s537 + $0x28] sm:$0xff]
        %v1358 = vld [vmem:[%s537 + $0x30] sm:$0xff]
        %v1359 = vld [vmem:[%s537 + $0x38] sm:$0xff]
        %v1360 = vld [vmem:[%s537 + $0x40] sm:$0xff]
        %v1361 = vld [vmem:[%s537 + $0x48] sm:$0xff]
        %v1362 = vld [vmem:[%s537 + $0x50] sm:$0xff]
        %v1363 = vld [vmem:[%s537 + $0x58] sm:$0xff]
        %v1364 = vld [vmem:[%s537 + $0x60] sm:$0xff]
        %v1365 = vld [vmem:[%s537 + $0x68] sm:$0xff]
        %v1366 = vld [vmem:[%s537 + $0x70] sm:$0xff]
        %v1367 = vld [vmem:[%s537 + $0x78] sm:$0xff]
        %v1368 = vld [vmem:[%s537 + $0x80] sm:$0xff]
        %v1369 = vld [vmem:[%s537 + $0x88] sm:$0xff]
        %v1370 = vld [vmem:[%s537 + $0x90] sm:$0xff]
        %v1371 = vld [vmem:[%s537 + $0x98] sm:$0xff]
        %v1372 = vld [vmem:[%s537 + $0xa0] sm:$0xff]
        %v1373 = vld [vmem:[%s537 + $0xa8] sm:$0xff]
        %v1374 = vld [vmem:[%s537 + $0xb0] sm:$0xff]
        %v1375 = vld [vmem:[%s537 + $0xb8] sm:$0xff]
        %v1376 = vld [vmem:[%s537 + $0xc0] sm:$0xff]
        %v1377 = vld [vmem:[%s537 + $0xc8] sm:$0xff]
        %v1378 = vld [vmem:[%s537 + $0xd0] sm:$0xff]
        %v1379 = vld [vmem:[%s537 + $0xd8] sm:$0xff]
        %v1380 = vld [vmem:[%s537 + $0xe0] sm:$0xff]
        %v1381 = vld [vmem:[%s537 + $0xe8] sm:$0xff]
        %v1382 = vld [vmem:[%s537 + $0xf0] sm:$0xff]
        %v1383 = vld [vmem:[%s537 + $0xf8] sm:$0xff]
        %v1384 = vld [vmem:[%s537 + $0x100] sm:$0xff]
        %v1385 = vld [vmem:[%s537 + $0x108] sm:$0xff]
        %v1386 = vld [vmem:[%s537 + $0x110] sm:$0xff]
        %v1387 = vld [vmem:[%s537 + $0x118] sm:$0xff]
        %v1388 = vld [vmem:[%s537 + $0x120] sm:$0xff]
        %v1389 = vld [vmem:[%s537 + $0x128] sm:$0xff]
        %v1390 = vld [vmem:[%s537 + $0x130] sm:$0xff]
        %v1391 = vld [vmem:[%s537 + $0x138] sm:$0xff]
        %v1392 = vld [vmem:[%s537 + $0x140] sm:$0xff]
        %v1393 = vld [vmem:[%s537 + $0x148] sm:$0xff]
        %v1394 = vld [vmem:[%s537 + $0x150] sm:$0xff]
        %v1395 = vld [vmem:[%s537 + $0x158] sm:$0xff]
        %v1396 = vld [vmem:[%s537 + $0x160] sm:$0xff]
        %v1397 = vld [vmem:[%s537 + $0x168] sm:$0xff]
        %v1398 = vld [vmem:[%s537 + $0x170] sm:$0xff]
        %v1399 = vld [vmem:[%s537 + $0x178] sm:$0xff]
        %v1400 = vld [vmem:[%s636] sm:$0x1]
        %v1402 = vlaneseq
        %v1403 = vshrl.u32 %v1402, 7
        %v1404 = vsub.s32 0, %v1403
        %v1405 = vrot.slane %v1400, %v1404
        %1407 = vmatprep.subr.mxu0 0.0
        %1408 = vmatpush1.msra.mxu0 %v1352
        %1409 = vmatprep.subr.mxu0 0.0
        %1410 = vmatpush1.msra.mxu0 %v1353
        %1411 = vmatprep.subr.mxu0 0.0
        %1412 = vmatpush1.msra.mxu0 %v1354
        %1413 = vmatprep.subr.mxu0 0.0
        %1414 = vmatpush1.msra.mxu0 %v1355
        %1415 = vmatprep.subr.mxu0 0.0
        %1416 = vmatpush1.msra.mxu0 %v1356
        %1417 = vmatprep.subr.mxu0 0.0
        %1418 = vmatpush1.msra.mxu0 %v1357
        %1419 = vmatprep.subr.mxu0 0.0
        %1420 = vmatpush1.msra.mxu0 %v1358
        %1421 = vmatprep.subr.mxu0 0.0
        %1422 = vmatpush1.msra.mxu0 %v1359
        %1423 = vmatprep.subr.mxu0 0.0
        %1424 = vmatpush1.msra.mxu0 %v1360
        %1425 = vmatprep.subr.mxu0 0.0
        %1426 = vmatpush1.msra.mxu0 %v1361
        %1427 = vmatprep.subr.mxu0 0.0
        %1428 = vmatpush1.msra.mxu0 %v1362
        %1429 = vmatprep.subr.mxu0 0.0
        %1430 = vmatpush1.msra.mxu0 %v1363
        %1431 = vmatprep.subr.mxu0 0.0
        %1432 = vmatpush1.msra.mxu0 %v1364
        %1433 = vmatprep.subr.mxu0 0.0
        %1434 = vmatpush1.msra.mxu0 %v1365
        %1435 = vmatprep.subr.mxu0 0.0
        %1436 = vmatpush1.msra.mxu0 %v1366
        %1437 = vmatprep.subr.mxu0 0.0
        %1438 = vmatpush1.msra.mxu0 %v1367
        %1439 = vmatprep.subr.mxu0 0.0
        %1440 = vmatpush1.msra.mxu0 %v1368
        %1441 = vmatprep.subr.mxu0 0.0
        %1442 = vmatpush1.msra.mxu0 %v1369
        %1443 = vmatprep.subr.mxu0 0.0
        %1444 = vmatpush1.msra.mxu0 %v1370
        %1445 = vmatprep.subr.mxu0 0.0
        %1446 = vmatpush1.msra.mxu0 %v1371
        %1447 = vmatprep.subr.mxu0 0.0
        %1448 = vmatpush1.msra.mxu0 %v1372
        %1449 = vmatprep.subr.mxu0 0.0
        %1450 = vmatpush1.msra.mxu0 %v1373
        %1451 = vmatprep.subr.mxu0 0.0
        %1452 = vmatpush1.msra.mxu0 %v1374
        %1453 = vmatprep.subr.mxu0 0.0
        %1454 = vmatpush1.msra.mxu0 %v1375
        %1455 = vmatprep.subr.mxu0 0.0
        %1456 = vmatpush1.msra.mxu0 %v1376
        %1457 = vmatprep.subr.mxu0 0.0
        %1458 = vmatpush1.msra.mxu0 %v1377
        %1459 = vmatprep.subr.mxu0 0.0
        %1460 = vmatpush1.msra.mxu0 %v1378
        %1461 = vmatprep.subr.mxu0 0.0
        %1462 = vmatpush1.msra.mxu0 %v1379
        %1463 = vmatprep.subr.mxu0 0.0
        %1464 = vmatpush1.msra.mxu0 %v1380
        %1465 = vmatprep.subr.mxu0 0.0
        %1466 = vmatpush1.msra.mxu0 %v1381
        %1467 = vmatprep.subr.mxu0 0.0
        %1468 = vmatpush1.msra.mxu0 %v1382
        %1469 = vmatprep.subr.mxu0 0.0
        %1470 = vmatpush1.msra.mxu0 %v1383
        %1471 = vmatprep.mubr.f32.mxu0 %v1332
        %1472 = vmatmul.mubr.f32.gmra.mrb[0].mxu0 %v1308
        %v1473 = vpop.f32.mrb[0].mxu0
        %v1474 = vadd.f32 %v1405, %v1473
        %v1475 = vpop.f32.mrb[0].mxu0
        %1476 = vmatprep.mubr.f32.mxu0 %v1334
        %1477 = vmatmul.mubr.f32.gmra.mrb[0].mxu0 %v1313
        %v1478 = vpop.f32.mrb[0].mxu0
        %v1479 = vadd.f32 %v1405, %v1478
        %v1480 = vpop.f32.mrb[0].mxu0
        %1481 = vmatprep.mubr.f32.mxu0 %v1336
        %1482 = vmatmul.mubr.f32.gmra.mrb[0].mxu0 %v1318
        %v1483 = vpop.f32.mrb[0].mxu0
        %v1484 = vadd.f32 %v1405, %v1483
        %v1485 = vpop.f32.mrb[0].mxu0
        %1486 = vmatprep.mubr.f32.mxu0 %v1335
        %1487 = vmatmul.mubr.f32.gmra.mrb[0].mxu0 %v1323
        %v1488 = vpop.f32.mrb[0].mxu0
        %v1489 = vadd.f32 %v1405, %v1488
        %v1490 = vpop.f32.mrb[0].mxu0
        %1491 = vdwg.mxu0
        %1492 = vmatprep.subr.mxu0 0.0
        %1493 = vmatpush1.msra.mxu0 %v1384
        %1494 = vmatprep.subr.mxu0 0.0
        %1495 = vmatpush1.msra.mxu0 %v1385
        %1496 = vmatprep.subr.mxu0 0.0
        %1497 = vmatpush1.msra.mxu0 %v1386
        %1498 = vmatprep.subr.mxu0 0.0
        %1499 = vmatpush1.msra.mxu0 %v1387
        %1500 = vmatprep.subr.mxu0 0.0
        %1501 = vmatpush1.msra.mxu0 %v1388
        %1502 = vmatprep.subr.mxu0 0.0
        %1503 = vmatpush1.msra.mxu0 %v1389
        %1504 = vmatprep.subr.mxu0 0.0
        %1505 = vmatpush1.msra.mxu0 %v1390
        %1506 = vmatprep.subr.mxu0 0.0
        %1507 = vmatpush1.msra.mxu0 %v1391
        %1508 = vmatprep.subr.mxu0 0.0
        %1509 = vmatpush1.msra.mxu0 %v1392
        %1510 = vmatprep.subr.mxu0 0.0
        %1511 = vmatpush1.msra.mxu0 %v1393
        %1512 = vmatprep.subr.mxu0 0.0
        %1513 = vmatpush1.msra.mxu0 %v1394
        %1514 = vmatprep.subr.mxu0 0.0
        %1515 = vmatpush1.msra.mxu0 %v1395
        %1516 = vmatprep.subr.mxu0 0.0
        %1517 = vmatpush1.msra.mxu0 %v1396
        %1518 = vmatprep.subr.mxu0 0.0
        %1519 = vmatpush1.msra.mxu0 %v1397
        %1520 = vmatprep.subr.mxu0 0.0
        %1521 = vmatpush1.msra.mxu0 %v1398
        %1522 = vmatprep.subr.mxu0 0.0
        %1523 = vmatpush1.msra.mxu0 %v1399
        %1524 = vmatprep.subr.mxu0 0.0
        %1525 = vmatpush1.msra.mxu0 0.0
        %1526 = vmatprep.subr.mxu0 0.0
        %1527 = vmatpush1.msra.mxu0 0.0
        %1528 = vmatprep.subr.mxu0 0.0
        %1529 = vmatpush1.msra.mxu0 0.0
        %1530 = vmatprep.subr.mxu0 0.0
        %1531 = vmatpush1.msra.mxu0 0.0
        %1532 = vmatprep.subr.mxu0 0.0
        %1533 = vmatpush1.msra.mxu0 0.0
        %1534 = vmatprep.subr.mxu0 0.0
        %1535 = vmatpush1.msra.mxu0 0.0
        %1536 = vmatprep.subr.mxu0 0.0
        %1537 = vmatpush1.msra.mxu0 0.0
        %1538 = vmatprep.subr.mxu0 0.0
        %1539 = vmatpush1.msra.mxu0 0.0
        %1540 = vmatprep.subr.mxu0 0.0
        %1541 = vmatpush1.msra.mxu0 0.0
        %1542 = vmatprep.subr.mxu0 0.0
        %1543 = vmatpush1.msra.mxu0 0.0
        %1544 = vmatprep.subr.mxu0 0.0
        %1545 = vmatpush1.msra.mxu0 0.0
        %1546 = vmatprep.subr.mxu0 0.0
        %1547 = vmatpush1.msra.mxu0 0.0
        %1548 = vmatprep.subr.mxu0 0.0
        %1549 = vmatpush1.msra.mxu0 0.0
        %1550 = vmatprep.subr.mxu0 0.0
        %1551 = vmatpush1.msra.mxu0 0.0
        %1552 = vmatprep.subr.mxu0 0.0
        %1553 = vmatpush1.msra.mxu0 0.0
        %1554 = vmatprep.subr.mxu0 0.0
        %1555 = vmatpush1.msra.mxu0 0.0
        %1556 = vmatprep.mubr.f32.mxu0 0.0
        %1557 = vmatmul.mubr.f32.gmra.mrb[0].mxu0 %v1343
        %v1558 = vpop.f32.mrb[0].mxu0
        %v1559 = vadd.f32 %v1474, %v1558
        %v1560 = vpop.f32.mrb[0].mxu0
        %1561 = vmatprep.mubr.f32.mxu0 0.0
        %1562 = vmatmul.mubr.f32.gmra.mrb[0].mxu0 %v1345
        %v1563 = vpop.f32.mrb[0].mxu0
        %v1564 = vadd.f32 %v1479, %v1563
        %v1565 = vpop.f32.mrb[0].mxu0
        %1566 = vmatprep.mubr.f32.mxu0 0.0
        %1567 = vmatmul.mubr.f32.gmra.mrb[0].mxu0 %v1347
        %v1568 = vpop.f32.mrb[0].mxu0
        %v1569 = vadd.f32 %v1484, %v1568
        %v1570 = vpop.f32.mrb[0].mxu0
        %1571 = vmatprep.mubr.f32.mxu0 0.0
        %1572 = vmatmul.mubr.f32.gmra.mrb[0].mxu0 %v1346
        %v1573 = vpop.f32.mrb[0].mxu0
        %v1574 = vadd.f32 %v1489, %v1573
        %v1575 = vpop.f32.mrb[0].mxu0
        %1576 = vdwg.mxu0
        %v1577 = vmax.f32 %v1559, 0.0
        %v1578 = vmax.f32 %v1564, 0.0
        %v1579 = vmax.f32 %v1569, 0.0
        %v1580 = vmax.f32 %v1574, 0.0
        %v1585 = vrot.slane %v1577, 1
        %v1586 = vrot.slane %v1578, 1
        %v1587 = vsel %vm833, %v1585, %v1586
        %v1588 = vrot.slane %v1579, 1
        %v1589 = vsel %vm833, %v1586, %v1588
        %v1590 = vrot.slane %v1580, 1
        %v1591 = vsel %vm833, %v1588, %v1590
        %v1595 = vrot.slane %v1577, 2
        %v1596 = vrot.slane %v1578, 2
        %v1597 = vsel %vm857, %v1595, %v1596
        %v1598 = vrot.slane %v1579, 2
        %v1599 = vsel %vm857, %v1596, %v1598
        %v1600 = vrot.slane %v1580, 2
        %v1601 = vsel %vm857, %v1598, %v1600
        %v1605 = vld [vmem:[%s641] sm:$0xff]
        %v1606 = vld [vmem:[%s641 + $0x8] sm:$0xff]
        %v1607 = vld [vmem:[%s641 + $0x10] sm:$0xff]
        %v1608 = vld [vmem:[%s641 + $0x18] sm:$0xff]
        %v1609 = vld [vmem:[%s641 + $0x20] sm:$0xff]
        %v1610 = vld [vmem:[%s641 + $0x28] sm:$0xff]
        %v1611 = vld [vmem:[%s641 + $0x30] sm:$0xff]
        %v1612 = vld [vmem:[%s641 + $0x38] sm:$0xff]
        %v1613 = vld [vmem:[%s641 + $0x40] sm:$0xff]
        %v1614 = vld [vmem:[%s641 + $0x48] sm:$0xff]
        %v1615 = vld [vmem:[%s641 + $0x50] sm:$0xff]
        %v1616 = vld [vmem:[%s641 + $0x58] sm:$0xff]
        %v1617 = vld [vmem:[%s641 + $0x60] sm:$0xff]
        %v1618 = vld [vmem:[%s641 + $0x68] sm:$0xff]
        %v1619 = vld [vmem:[%s641 + $0x70] sm:$0xff]
        %v1620 = vld [vmem:[%s641 + $0x78] sm:$0xff]
        %v1621 = vld [vmem:[%s641 + $0x80] sm:$0xff]
        %v1622 = vld [vmem:[%s641 + $0x88] sm:$0xff]
        %v1623 = vld [vmem:[%s641 + $0x90] sm:$0xff]
        %v1624 = vld [vmem:[%s641 + $0x98] sm:$0xff]
        %v1625 = vld [vmem:[%s641 + $0xa0] sm:$0xff]
        %v1626 = vld [vmem:[%s641 + $0xa8] sm:$0xff]
        %v1627 = vld [vmem:[%s641 + $0xb0] sm:$0xff]
        %v1628 = vld [vmem:[%s641 + $0xb8] sm:$0xff]
        %v1629 = vld [vmem:[%s641 + $0xc0] sm:$0xff]
        %v1630 = vld [vmem:[%s641 + $0xc8] sm:$0xff]
        %v1631 = vld [vmem:[%s641 + $0xd0] sm:$0xff]
        %v1632 = vld [vmem:[%s641 + $0xd8] sm:$0xff]
        %v1633 = vld [vmem:[%s641 + $0xe0] sm:$0xff]
        %v1634 = vld [vmem:[%s641 + $0xe8] sm:$0xff]
        %v1635 = vld [vmem:[%s641 + $0xf0] sm:$0xff]
        %v1636 = vld [vmem:[%s641 + $0xf8] sm:$0xff]
        %v1637 = vld [vmem:[%s641 + $0x100] sm:$0xff]
        %v1638 = vld [vmem:[%s641 + $0x108] sm:$0xff]
        %v1639 = vld [vmem:[%s641 + $0x110] sm:$0xff]
        %v1640 = vld [vmem:[%s641 + $0x118] sm:$0xff]
        %v1641 = vld [vmem:[%s641 + $0x120] sm:$0xff]
        %v1642 = vld [vmem:[%s641 + $0x128] sm:$0xff]
        %v1643 = vld [vmem:[%s641 + $0x130] sm:$0xff]
        %v1644 = vld [vmem:[%s641 + $0x138] sm:$0xff]
        %v1645 = vld [vmem:[%s641 + $0x140] sm:$0xff]
        %v1646 = vld [vmem:[%s641 + $0x148] sm:$0xff]
        %v1647 = vld [vmem:[%s641 + $0x150] sm:$0xff]
        %v1648 = vld [vmem:[%s641 + $0x158] sm:$0xff]
        %v1649 = vld [vmem:[%s641 + $0x160] sm:$0xff]
        %v1650 = vld [vmem:[%s641 + $0x168] sm:$0xff]
        %v1651 = vld [vmem:[%s641 + $0x170] sm:$0xff]
        %v1652 = vld [vmem:[%s641 + $0x178] sm:$0xff]
        %v1653 = vld [vmem:[%s644] sm:$0x1]
        %v1655 = vlaneseq
        %v1656 = vshrl.u32 %v1655, 7
        %v1657 = vsub.s32 0, %v1656
        %v1658 = vrot.slane %v1653, %v1657
        %1660 = vmatprep.subr.mxu0 0.0
        %1661 = vmatpush1.msra.mxu0 %v1605
        %1662 = vmatprep.subr.mxu0 0.0
        %1663 = vmatpush1.msra.mxu0 %v1606
        %1664 = vmatprep.subr.mxu0 0.0
        %1665 = vmatpush1.msra.mxu0 %v1607
        %1666 = vmatprep.subr.mxu0 0.0
        %1667 = vmatpush1.msra.mxu0 %v1608
        %1668 = vmatprep.subr.mxu0 0.0
        %1669 = vmatpush1.msra.mxu0 %v1609
        %1670 = vmatprep.subr.mxu0 0.0
        %1671 = vmatpush1.msra.mxu0 %v1610
        %1672 = vmatprep.subr.mxu0 0.0
        %1673 = vmatpush1.msra.mxu0 %v1611
        %1674 = vmatprep.subr.mxu0 0.0
        %1675 = vmatpush1.msra.mxu0 %v1612
        %1676 = vmatprep.subr.mxu0 0.0
        %1677 = vmatpush1.msra.mxu0 %v1613
        %1678 = vmatprep.subr.mxu0 0.0
        %1679 = vmatpush1.msra.mxu0 %v1614
        %1680 = vmatprep.subr.mxu0 0.0
        %1681 = vmatpush1.msra.mxu0 %v1615
        %1682 = vmatprep.subr.mxu0 0.0
        %1683 = vmatpush1.msra.mxu0 %v1616
        %1684 = vmatprep.subr.mxu0 0.0
        %1685 = vmatpush1.msra.mxu0 %v1617
        %1686 = vmatprep.subr.mxu0 0.0
        %1687 = vmatpush1.msra.mxu0 %v1618
        %1688 = vmatprep.subr.mxu0 0.0
        %1689 = vmatpush1.msra.mxu0 %v1619
        %1690 = vmatprep.subr.mxu0 0.0
        %1691 = vmatpush1.msra.mxu0 %v1620
        %1692 = vmatprep.subr.mxu0 0.0
        %1693 = vmatpush1.msra.mxu0 %v1621
        %1694 = vmatprep.subr.mxu0 0.0
        %1695 = vmatpush1.msra.mxu0 %v1622
        %1696 = vmatprep.subr.mxu0 0.0
        %1697 = vmatpush1.msra.mxu0 %v1623
        %1698 = vmatprep.subr.mxu0 0.0
        %1699 = vmatpush1.msra.mxu0 %v1624
        %1700 = vmatprep.subr.mxu0 0.0
        %1701 = vmatpush1.msra.mxu0 %v1625
        %1702 = vmatprep.subr.mxu0 0.0
        %1703 = vmatpush1.msra.mxu0 %v1626
        %1704 = vmatprep.subr.mxu0 0.0
        %1705 = vmatpush1.msra.mxu0 %v1627
        %1706 = vmatprep.subr.mxu0 0.0
        %1707 = vmatpush1.msra.mxu0 %v1628
        %1708 = vmatprep.subr.mxu0 0.0
        %1709 = vmatpush1.msra.mxu0 %v1629
        %1710 = vmatprep.subr.mxu0 0.0
        %1711 = vmatpush1.msra.mxu0 %v1630
        %1712 = vmatprep.subr.mxu0 0.0
        %1713 = vmatpush1.msra.mxu0 %v1631
        %1714 = vmatprep.subr.mxu0 0.0
        %1715 = vmatpush1.msra.mxu0 %v1632
        %1716 = vmatprep.subr.mxu0 0.0
        %1717 = vmatpush1.msra.mxu0 %v1633
        %1718 = vmatprep.subr.mxu0 0.0
        %1719 = vmatpush1.msra.mxu0 %v1634
        %1720 = vmatprep.subr.mxu0 0.0
        %1721 = vmatpush1.msra.mxu0 %v1635
        %1722 = vmatprep.subr.mxu0 0.0
        %1723 = vmatpush1.msra.mxu0 %v1636
        %1724 = vmatprep.mubr.f32.mxu0 %v1587
        %1725 = vmatmul.mubr.f32.gmra.mrb[0].mxu0 %v1577
        %v1726 = vpop.f32.mrb[0].mxu0
        %v1727 = vadd.f32 %v1658, %v1726
        %v1728 = vpop.f32.mrb[0].mxu0
        %1729 = vmatprep.mubr.f32.mxu0 %v1589
        %1730 = vmatmul.mubr.f32.gmra.mrb[0].mxu0 %v1578
        %v1731 = vpop.f32.mrb[0].mxu0
        %v1732 = vadd.f32 %v1658, %v1731
        %v1733 = vpop.f32.mrb[0].mxu0
        %1734 = vmatprep.mubr.f32.mxu0 %v1591
        %1735 = vmatmul.mubr.f32.gmra.mrb[0].mxu0 %v1579
        %v1736 = vpop.f32.mrb[0].mxu0
        %v1737 = vadd.f32 %v1658, %v1736
        %v1738 = vpop.f32.mrb[0].mxu0
        %1739 = vdwg.mxu0
        %1740 = vmatprep.subr.mxu0 0.0
        %1741 = vmatpush1.msra.mxu0 %v1637
        %1742 = vmatprep.subr.mxu0 0.0
        %1743 = vmatpush1.msra.mxu0 %v1638
        %1744 = vmatprep.subr.mxu0 0.0
        %1745 = vmatpush1.msra.mxu0 %v1639
        %1746 = vmatprep.subr.mxu0 0.0
        %1747 = vmatpush1.msra.mxu0 %v1640
        %1748 = vmatprep.subr.mxu0 0.0
        %1749 = vmatpush1.msra.mxu0 %v1641
        %1750 = vmatprep.subr.mxu0 0.0
        %1751 = vmatpush1.msra.mxu0 %v1642
        %1752 = vmatprep.subr.mxu0 0.0
        %1753 = vmatpush1.msra.mxu0 %v1643
        %1754 = vmatprep.subr.mxu0 0.0
        %1755 = vmatpush1.msra.mxu0 %v1644
        %1756 = vmatprep.subr.mxu0 0.0
        %1757 = vmatpush1.msra.mxu0 %v1645
        %1758 = vmatprep.subr.mxu0 0.0
        %1759 = vmatpush1.msra.mxu0 %v1646
        %1760 = vmatprep.subr.mxu0 0.0
        %1761 = vmatpush1.msra.mxu0 %v1647
        %1762 = vmatprep.subr.mxu0 0.0
        %1763 = vmatpush1.msra.mxu0 %v1648
        %1764 = vmatprep.subr.mxu0 0.0
        %1765 = vmatpush1.msra.mxu0 %v1649
        %1766 = vmatprep.subr.mxu0 0.0
        %1767 = vmatpush1.msra.mxu0 %v1650
        %1768 = vmatprep.subr.mxu0 0.0
        %1769 = vmatpush1.msra.mxu0 %v1651
        %1770 = vmatprep.subr.mxu0 0.0
        %1771 = vmatpush1.msra.mxu0 %v1652
        %1772 = vmatprep.subr.mxu0 0.0
        %1773 = vmatpush1.msra.mxu0 0.0
        %1774 = vmatprep.subr.mxu0 0.0
        %1775 = vmatpush1.msra.mxu0 0.0
        %1776 = vmatprep.subr.mxu0 0.0
        %1777 = vmatpush1.msra.mxu0 0.0
        %1778 = vmatprep.subr.mxu0 0.0
        %1779 = vmatpush1.msra.mxu0 0.0
        %1780 = vmatprep.subr.mxu0 0.0
        %1781 = vmatpush1.msra.mxu0 0.0
        %1782 = vmatprep.subr.mxu0 0.0
        %1783 = vmatpush1.msra.mxu0 0.0
        %1784 = vmatprep.subr.mxu0 0.0
        %1785 = vmatpush1.msra.mxu0 0.0
        %1786 = vmatprep.subr.mxu0 0.0
        %1787 = vmatpush1.msra.mxu0 0.0
        %1788 = vmatprep.subr.mxu0 0.0
        %1789 = vmatpush1.msra.mxu0 0.0
        %1790 = vmatprep.subr.mxu0 0.0
        %1791 = vmatpush1.msra.mxu0 0.0
        %1792 = vmatprep.subr.mxu0 0.0
        %1793 = vmatpush1.msra.mxu0 0.0
        %1794 = vmatprep.subr.mxu0 0.0
        %1795 = vmatpush1.msra.mxu0 0.0
        %1796 = vmatprep.subr.mxu0 0.0
        %1797 = vmatpush1.msra.mxu0 0.0
        %1798 = vmatprep.subr.mxu0 0.0
        %1799 = vmatpush1.msra.mxu0 0.0
        %1800 = vmatprep.subr.mxu0 0.0
        %1801 = vmatpush1.msra.mxu0 0.0
        %1802 = vmatprep.subr.mxu0 0.0
        %1803 = vmatpush1.msra.mxu0 0.0
        %1804 = vmatprep.mubr.f32.mxu0 0.0
        %1805 = vmatmul.mubr.f32.gmra.mrb[0].mxu0 %v1597
        %v1806 = vpop.f32.mrb[0].mxu0
        %v1807 = vadd.f32 %v1727, %v1806
        %v1808 = vpop.f32.mrb[0].mxu0
        %1809 = vmatprep.mubr.f32.mxu0 0.0
        %1810 = vmatmul.mubr.f32.gmra.mrb[0].mxu0 %v1599
        %v1811 = vpop.f32.mrb[0].mxu0
        %v1812 = vadd.f32 %v1732, %v1811
        %v1813 = vpop.f32.mrb[0].mxu0
        %1814 = vmatprep.mubr.f32.mxu0 0.0
        %1815 = vmatmul.mubr.f32.gmra.mrb[0].mxu0 %v1601
        %v1816 = vpop.f32.mrb[0].mxu0
        %v1817 = vadd.f32 %v1737, %v1816
        %v1818 = vpop.f32.mrb[0].mxu0
        %1819 = vdwg.mxu0
        %v1820 = vmax.f32 %v1807, 0.0
        %v1821 = vmax.f32 %v1812, 0.0
        %v1822 = vmax.f32 %v1817, 0.0
        %v1826 = vrot.slane %v1820, 1
        %v1827 = vrot.slane %v1821, 1
        %v1828 = vsel %vm833, %v1826, %v1827
        %v1829 = vrot.slane %v1822, 1
        %v1830 = vsel %vm833, %v1827, %v1829
        %v1834 = vmax.f32 %v1820, %v1828
        %v1835 = vmax.f32 %v1821, %v1830
        %v1836 = vmax.f32 %v1822, %v1829
        %v1838 = vrot.slane %v1834, 2
        %1839 = vrot.lane.b32.xlu0 %v1838, 64
        %v1840 = vpop.permute.xlu0 %1839
        %v1842 = vrot.slane %v1834, 4
        %v1844 = vrot.slane %v1834, 6
        %1845 = vrot.lane.b32.xlu0 %v1844, 64
        %v1846 = vpop.permute.xlu0 %1845
        %vm1848 = vcmask 523264
        %v1849 = vsel %vm1848, %v1834, %v1840
        %v1850 = vsel %vm1848, %v1842, %v1846
        %v1852 = vrot.slane %v1836, 2
        %1853 = vrot.lane.b32.xlu0 %v1852, 64
        %v1854 = vpop.permute.xlu0 %1853
        %v1856 = vrot.slane %v1836, 4
        %v1858 = vrot.slane %v1836, 6
        %1859 = vrot.lane.b32.xlu0 %v1858, 64
        %v1860 = vpop.permute.xlu0 %1859
        %v1862 = vsel %vm1848, %v1835, %v1854
        %v1863 = vsel %vm1848, %v1856, %v1860
        %v1866 = vrot.slane %v1862, 5
        %v1867 = vrot.slane %v1863, 5
        %v1868 = vrot.slane %v1836, 5
        %v1872 = vsel %vm1237, %v1849, %v1866
        %v1873 = vsel %vm1237, %v1850, %v1867
        %v1874 = vsel %vm1237, %v1835, %v1868
        %v1875 = vld [vmem:[%s649] sm:$0xff]
        %v1876 = vld [vmem:[%s649 + $0x8] sm:$0xff]
        %v1877 = vld [vmem:[%s649 + $0x10] sm:$0xff]
        %v1878 = vld [vmem:[%s649 + $0x18] sm:$0xff]
        %v1879 = vld [vmem:[%s649 + $0x20] sm:$0xff]
        %v1880 = vld [vmem:[%s649 + $0x28] sm:$0xff]
        %v1881 = vld [vmem:[%s649 + $0x30] sm:$0xff]
        %v1882 = vld [vmem:[%s649 + $0x38] sm:$0xff]
        %v1883 = vld [vmem:[%s649 + $0x40] sm:$0xff]
        %v1884 = vld [vmem:[%s649 + $0x48] sm:$0xff]
        %v1885 = vld [vmem:[%s649 + $0x50] sm:$0xff]
        %v1886 = vld [vmem:[%s649 + $0x58] sm:$0xff]
        %v1887 = vld [vmem:[%s649 + $0x60] sm:$0xff]
        %v1888 = vld [vmem:[%s649 + $0x68] sm:$0xff]
        %v1889 = vld [vmem:[%s649 + $0x70] sm:$0xff]
        %v1890 = vld [vmem:[%s649 + $0x78] sm:$0xff]
        %v1891 = vld [vmem:[%s649 + $0x80] sm:$0xff]
        %v1892 = vld [vmem:[%s649 + $0x88] sm:$0xff]
        %v1893 = vld [vmem:[%s649 + $0x90] sm:$0xff]
        %v1894 = vld [vmem:[%s649 + $0x98] sm:$0xff]
        %v1895 = vld [vmem:[%s649 + $0xa0] sm:$0xff]
        %v1896 = vld [vmem:[%s649 + $0xa8] sm:$0xff]
        %v1897 = vld [vmem:[%s649 + $0xb0] sm:$0xff]
        %v1898 = vld [vmem:[%s649 + $0xb8] sm:$0xff]
        %v1899 = vld [vmem:[%s649 + $0xc0] sm:$0xff]
        %v1900 = vld [vmem:[%s649 + $0xc8] sm:$0xff]
        %v1901 = vld [vmem:[%s649 + $0xd0] sm:$0xff]
        %v1902 = vld [vmem:[%s649 + $0xd8] sm:$0xff]
        %v1903 = vld [vmem:[%s649 + $0xe0] sm:$0xff]
        %v1904 = vld [vmem:[%s649 + $0xe8] sm:$0xff]
        %v1905 = vld [vmem:[%s649 + $0xf0] sm:$0xff]
        %v1906 = vld [vmem:[%s649 + $0xf8] sm:$0xff]
        %v1907 = vld [vmem:[%s649 + $0x100] sm:$0xff]
        %v1908 = vld [vmem:[%s649 + $0x108] sm:$0xff]
        %v1909 = vld [vmem:[%s649 + $0x110] sm:$0xff]
        %v1910 = vld [vmem:[%s649 + $0x118] sm:$0xff]
        %v1911 = vld [vmem:[%s649 + $0x120] sm:$0xff]
        %v1912 = vld [vmem:[%s649 + $0x128] sm:$0xff]
        %v1913 = vld [vmem:[%s649 + $0x130] sm:$0xff]
        %v1914 = vld [vmem:[%s649 + $0x138] sm:$0xff]
        %v1915 = vld [vmem:[%s649 + $0x140] sm:$0xff]
        %v1916 = vld [vmem:[%s649 + $0x148] sm:$0xff]
        %v1917 = vld [vmem:[%s649 + $0x150] sm:$0xff]
        %v1918 = vld [vmem:[%s649 + $0x158] sm:$0xff]
        %v1919 = vld [vmem:[%s649 + $0x160] sm:$0xff]
        %v1920 = vld [vmem:[%s649 + $0x168] sm:$0xff]
        %v1921 = vld [vmem:[%s649 + $0x170] sm:$0xff]
        %v1922 = vld [vmem:[%s649 + $0x178] sm:$0xff]
        %v1923 = vld [vmem:[%s649 + $0x180] sm:$0xff]
        %v1924 = vld [vmem:[%s649 + $0x188] sm:$0xff]
        %v1925 = vld [vmem:[%s649 + $0x190] sm:$0xff]
        %v1926 = vld [vmem:[%s649 + $0x198] sm:$0xff]
        %v1927 = vld [vmem:[%s649 + $0x1a0] sm:$0xff]
        %v1928 = vld [vmem:[%s649 + $0x1a8] sm:$0xff]
        %v1929 = vld [vmem:[%s649 + $0x1b0] sm:$0xff]
        %v1930 = vld [vmem:[%s649 + $0x1b8] sm:$0xff]
        %v1931 = vld [vmem:[%s649 + $0x1c0] sm:$0xff]
        %v1932 = vld [vmem:[%s649 + $0x1c8] sm:$0xff]
        %v1933 = vld [vmem:[%s649 + $0x1d0] sm:$0xff]
        %v1934 = vld [vmem:[%s649 + $0x1d8] sm:$0xff]
        %v1935 = vld [vmem:[%s649 + $0x1e0] sm:$0xff]
        %v1936 = vld [vmem:[%s649 + $0x1e8] sm:$0xff]
        %v1937 = vld [vmem:[%s649 + $0x1f0] sm:$0xff]
        %v1938 = vld [vmem:[%s649 + $0x1f8] sm:$0xff]
        %v1939 = vld [vmem:[%s649 + $0x200] sm:$0xff]
        %v1940 = vld [vmem:[%s649 + $0x208] sm:$0xff]
        %v1941 = vld [vmem:[%s649 + $0x210] sm:$0xff]
        %v1942 = vld [vmem:[%s649 + $0x218] sm:$0xff]
        %v1943 = vld [vmem:[%s649 + $0x220] sm:$0xff]
        %v1944 = vld [vmem:[%s649 + $0x228] sm:$0xff]
        %v1945 = vld [vmem:[%s649 + $0x230] sm:$0xff]
        %v1946 = vld [vmem:[%s649 + $0x238] sm:$0xff]
        %v1947 = vld [vmem:[%s649 + $0x240] sm:$0xff]
        %v1948 = vld [vmem:[%s649 + $0x248] sm:$0xff]
        %v1949 = vld [vmem:[%s649 + $0x250] sm:$0xff]
        %v1950 = vld [vmem:[%s649 + $0x258] sm:$0xff]
        %v1951 = vld [vmem:[%s649 + $0x260] sm:$0xff]
        %v1952 = vld [vmem:[%s649 + $0x268] sm:$0xff]
        %v1953 = vld [vmem:[%s649 + $0x270] sm:$0xff]
        %v1954 = vld [vmem:[%s649 + $0x278] sm:$0xff]
        %v1955 = vld [vmem:[%s653] sm:$0x3]
        %v1957 = vlaneseq
        %v1958 = vshrl.u32 %v1957, 7
        %v1959 = vsub.s32 0, %v1958
        %v1960 = vrot.slane %v1955, %v1959
        %v1961 = vlaneseq
        %v1962 = vshrl.u32 %v1961, 7
        %v1963 = vsub.s32 1, %v1962
        %v1964 = vrot.slane %v1955, %v1963
        %v1968 = vsel %vm1848, %v1874, 0
        %1970 = vmatprep.subr.mxu0 %v1876
        %1971 = vmatpush1.msra.mxu0 %v1875
        %1972 = vmatprep.subr.mxu0 %v1878
        %1973 = vmatpush1.msra.mxu0 %v1877
        %1974 = vmatprep.subr.mxu0 %v1880
        %1975 = vmatpush1.msra.mxu0 %v1879
        %1976 = vmatprep.subr.mxu0 %v1882
        %1977 = vmatpush1.msra.mxu0 %v1881
        %1978 = vmatprep.subr.mxu0 %v1884
        %1979 = vmatpush1.msra.mxu0 %v1883
        %1980 = vmatprep.subr.mxu0 %v1886
        %1981 = vmatpush1.msra.mxu0 %v1885
        %1982 = vmatprep.subr.mxu0 %v1888
        %1983 = vmatpush1.msra.mxu0 %v1887
        %1984 = vmatprep.subr.mxu0 %v1890
        %1985 = vmatpush1.msra.mxu0 %v1889
        %1986 = vmatprep.subr.mxu0 %v1892
        %1987 = vmatpush1.msra.mxu0 %v1891
        %1988 = vmatprep.subr.mxu0 %v1894
        %1989 = vmatpush1.msra.mxu0 %v1893
        %1990 = vmatprep.subr.mxu0 %v1896
        %1991 = vmatpush1.msra.mxu0 %v1895
        %1992 = vmatprep.subr.mxu0 %v1898
        %1993 = vmatpush1.msra.mxu0 %v1897
        %1994 = vmatprep.subr.mxu0 %v1900
        %1995 = vmatpush1.msra.mxu0 %v1899
        %1996 = vmatprep.subr.mxu0 %v1902
        %1997 = vmatpush1.msra.mxu0 %v1901
        %1998 = vmatprep.subr.mxu0 %v1904
        %1999 = vmatpush1.msra.mxu0 %v1903
        %2000 = vmatprep.subr.mxu0 %v1906
        %2001 = vmatpush1.msra.mxu0 %v1905
        %2002 = vmatprep.subr.mxu0 %v1908
        %2003 = vmatpush1.msra.mxu0 %v1907
        %2004 = vmatprep.subr.mxu0 %v1910
        %2005 = vmatpush1.msra.mxu0 %v1909
        %2006 = vmatprep.subr.mxu0 %v1912
        %2007 = vmatpush1.msra.mxu0 %v1911
        %2008 = vmatprep.subr.mxu0 %v1914
        %2009 = vmatpush1.msra.mxu0 %v1913
        %2010 = vmatprep.subr.mxu0 %v1916
        %2011 = vmatpush1.msra.mxu0 %v1915
        %2012 = vmatprep.subr.mxu0 %v1918
        %2013 = vmatpush1.msra.mxu0 %v1917
        %2014 = vmatprep.subr.mxu0 %v1920
        %2015 = vmatpush1.msra.mxu0 %v1919
        %2016 = vmatprep.subr.mxu0 %v1922
        %2017 = vmatpush1.msra.mxu0 %v1921
        %2018 = vmatprep.subr.mxu0 %v1924
        %2019 = vmatpush1.msra.mxu0 %v1923
        %2020 = vmatprep.subr.mxu0 %v1926
        %2021 = vmatpush1.msra.mxu0 %v1925
        %2022 = vmatprep.subr.mxu0 %v1928
        %2023 = vmatpush1.msra.mxu0 %v1927
        %2024 = vmatprep.subr.mxu0 %v1930
        %2025 = vmatpush1.msra.mxu0 %v1929
        %2026 = vmatprep.subr.mxu0 %v1932
        %2027 = vmatpush1.msra.mxu0 %v1931
        %2028 = vmatprep.subr.mxu0 %v1934
        %2029 = vmatpush1.msra.mxu0 %v1933
        %2030 = vmatprep.subr.mxu0 %v1936
        %2031 = vmatpush1.msra.mxu0 %v1935
        %2032 = vmatprep.subr.mxu0 %v1938
        %2033 = vmatpush1.msra.mxu0 %v1937
        %2034 = vmatprep.mubr.f32.mxu0 %v1873
        %2035 = vmatmul.mubr.f32.gmra.mrb[0].mxu0 %v1872
        %v2036 = vpop.f32.mrb[0].mxu0
        %v2037 = vadd.f32 %v1960, %v2036
        %v2038 = vpop.f32.mrb[0].mxu0
        %v2039 = vadd.f32 %v1964, %v2038
        %2040 = vdwg.mxu0
        %2041 = vmatprep.subr.mxu0 %v1940
        %2042 = vmatpush1.msra.mxu0 %v1939
        %2043 = vmatprep.subr.mxu0 %v1942
        %2044 = vmatpush1.msra.mxu0 %v1941
        %2045 = vmatprep.subr.mxu0 %v1944
        %2046 = vmatpush1.msra.mxu0 %v1943
        %2047 = vmatprep.subr.mxu0 %v1946
        %2048 = vmatpush1.msra.mxu0 %v1945
        %2049 = vmatprep.subr.mxu0 %v1948
        %2050 = vmatpush1.msra.mxu0 %v1947
        %2051 = vmatprep.subr.mxu0 %v1950
        %2052 = vmatpush1.msra.mxu0 %v1949
        %2053 = vmatprep.subr.mxu0 %v1952
        %2054 = vmatpush1.msra.mxu0 %v1951
        %2055 = vmatprep.subr.mxu0 %v1954
        %2056 = vmatpush1.msra.mxu0 %v1953
        %2057 = vmatprep.subr.mxu0 0.0
        %2058 = vmatpush1.msra.mxu0 0.0
        %2059 = vmatprep.subr.mxu0 0.0
        %2060 = vmatpush1.msra.mxu0 0.0
        %2061 = vmatprep.subr.mxu0 0.0
        %2062 = vmatpush1.msra.mxu0 0.0
        %2063 = vmatprep.subr.mxu0 0.0
        %2064 = vmatpush1.msra.mxu0 0.0
        %2065 = vmatprep.subr.mxu0 0.0
        %2066 = vmatpush1.msra.mxu0 0.0
        %2067 = vmatprep.subr.mxu0 0.0
        %2068 = vmatpush1.msra.mxu0 0.0
        %2069 = vmatprep.subr.mxu0 0.0
        %2070 = vmatpush1.msra.mxu0 0.0
        %2071 = vmatprep.subr.mxu0 0.0
        %2072 = vmatpush1.msra.mxu0 0.0
        %2073 = vmatprep.subr.mxu0 0.0
        %2074 = vmatpush1.msra.mxu0 0.0
        %2075 = vmatprep.subr.mxu0 0.0
        %2076 = vmatpush1.msra.mxu0 0.0
        %2077 = vmatprep.subr.mxu0 0.0
        %2078 = vmatpush1.msra.mxu0 0.0
        %2079 = vmatprep.subr.mxu0 0.0
        %2080 = vmatpush1.msra.mxu0 0.0
        %2081 = vmatprep.subr.mxu0 0.0
        %2082 = vmatpush1.msra.mxu0 0.0
        %2083 = vmatprep.subr.mxu0 0.0
        %2084 = vmatpush1.msra.mxu0 0.0
        %2085 = vmatprep.subr.mxu0 0.0
        %2086 = vmatpush1.msra.mxu0 0.0
        %2087 = vmatprep.subr.mxu0 0.0
        %2088 = vmatpush1.msra.mxu0 0.0
        %2089 = vmatprep.subr.mxu0 0.0
        %2090 = vmatpush1.msra.mxu0 0.0
        %2091 = vmatprep.subr.mxu0 0.0
        %2092 = vmatpush1.msra.mxu0 0.0
        %2093 = vmatprep.subr.mxu0 0.0
        %2094 = vmatpush1.msra.mxu0 0.0
        %2095 = vmatprep.subr.mxu0 0.0
        %2096 = vmatpush1.msra.mxu0 0.0
        %2097 = vmatprep.subr.mxu0 0.0
        %2098 = vmatpush1.msra.mxu0 0.0
        %2099 = vmatprep.subr.mxu0 0.0
        %2100 = vmatpush1.msra.mxu0 0.0
        %2101 = vmatprep.subr.mxu0 0.0
        %2102 = vmatpush1.msra.mxu0 0.0
        %2103 = vmatprep.subr.mxu0 0.0
        %2104 = vmatpush1.msra.mxu0 0.0
        %2105 = vmatprep.mubr.f32.mxu0 0.0
        %2106 = vmatmul.mubr.f32.gmra.mrb[0].mxu0 %v1968
        %v2107 = vpop.f32.mrb[0].mxu0
        %v2108 = vadd.f32 %v2037, %v2107
        %v2109 = vpop.f32.mrb[0].mxu0
        %v2110 = vadd.f32 %v2039, %v2109
        %2111 = vdwg.mxu0
        %v2112 = vmax.f32 %v2108, 0.0
        %v2113 = vmax.f32 %v2110, 0.0
        %v2114 = vld [vmem:[%s658] sm:$0xff]
        %v2115 = vld [vmem:[%s658 + $0x8] sm:$0xff]
        %v2116 = vld [vmem:[%s658 + $0x10] sm:$0xff]
        %v2117 = vld [vmem:[%s658 + $0x18] sm:$0xff]
        %v2118 = vld [vmem:[%s658 + $0x20] sm:$0xff]
        %v2119 = vld [vmem:[%s658 + $0x28] sm:$0xff]
        %v2120 = vld [vmem:[%s658 + $0x30] sm:$0xff]
        %v2121 = vld [vmem:[%s658 + $0x38] sm:$0xff]
        %v2122 = vld [vmem:[%s658 + $0x40] sm:$0xff]
        %v2123 = vld [vmem:[%s658 + $0x48] sm:$0xff]
        %v2124 = vld [vmem:[%s658 + $0x50] sm:$0xff]
        %v2125 = vld [vmem:[%s658 + $0x58] sm:$0xff]
        %v2126 = vld [vmem:[%s658 + $0x60] sm:$0xff]
        %v2127 = vld [vmem:[%s658 + $0x68] sm:$0xff]
        %v2128 = vld [vmem:[%s658 + $0x70] sm:$0xff]
        %v2129 = vld [vmem:[%s658 + $0x78] sm:$0xff]
        %v2130 = vld [vmem:[%s658 + $0x80] sm:$0xff]
        %v2131 = vld [vmem:[%s658 + $0x88] sm:$0xff]
        %v2132 = vld [vmem:[%s658 + $0x90] sm:$0xff]
        %v2133 = vld [vmem:[%s658 + $0x98] sm:$0xff]
        %v2134 = vld [vmem:[%s658 + $0xa0] sm:$0xff]
        %v2135 = vld [vmem:[%s658 + $0xa8] sm:$0xff]
        %v2136 = vld [vmem:[%s658 + $0xb0] sm:$0xff]
        %v2137 = vld [vmem:[%s658 + $0xb8] sm:$0xff]
        %v2138 = vld [vmem:[%s658 + $0xc0] sm:$0xff]
        %v2139 = vld [vmem:[%s658 + $0xc8] sm:$0xff]
        %v2140 = vld [vmem:[%s658 + $0xd0] sm:$0xff]
        %v2141 = vld [vmem:[%s658 + $0xd8] sm:$0xff]
        %v2142 = vld [vmem:[%s658 + $0xe0] sm:$0xff]
        %v2143 = vld [vmem:[%s658 + $0xe8] sm:$0xff]
        %v2144 = vld [vmem:[%s658 + $0xf0] sm:$0xff]
        %v2145 = vld [vmem:[%s658 + $0xf8] sm:$0xff]
        %v2146 = vld [vmem:[%s661] sm:$0x1]
        %v2148 = vlaneseq
        %v2149 = vshrl.u32 %v2148, 7
        %v2150 = vsub.s32 0, %v2149
        %v2151 = vrot.slane %v2146, %v2150
        %2153 = vmatprep.subr.mxu0 0.0
        %2154 = vmatpush1.msra.mxu0 %v2114
        %2155 = vmatprep.subr.mxu0 0.0
        %2156 = vmatpush1.msra.mxu0 %v2115
        %2157 = vmatprep.subr.mxu0 0.0
        %2158 = vmatpush1.msra.mxu0 %v2116
        %2159 = vmatprep.subr.mxu0 0.0
        %2160 = vmatpush1.msra.mxu0 %v2117
        %2161 = vmatprep.subr.mxu0 0.0
        %2162 = vmatpush1.msra.mxu0 %v2118
        %2163 = vmatprep.subr.mxu0 0.0
        %2164 = vmatpush1.msra.mxu0 %v2119
        %2165 = vmatprep.subr.mxu0 0.0
        %2166 = vmatpush1.msra.mxu0 %v2120
        %2167 = vmatprep.subr.mxu0 0.0
        %2168 = vmatpush1.msra.mxu0 %v2121
        %2169 = vmatprep.subr.mxu0 0.0
        %2170 = vmatpush1.msra.mxu0 %v2122
        %2171 = vmatprep.subr.mxu0 0.0
        %2172 = vmatpush1.msra.mxu0 %v2123
        %2173 = vmatprep.subr.mxu0 0.0
        %2174 = vmatpush1.msra.mxu0 %v2124
        %2175 = vmatprep.subr.mxu0 0.0
        %2176 = vmatpush1.msra.mxu0 %v2125
        %2177 = vmatprep.subr.mxu0 0.0
        %2178 = vmatpush1.msra.mxu0 %v2126
        %2179 = vmatprep.subr.mxu0 0.0
        %2180 = vmatpush1.msra.mxu0 %v2127
        %2181 = vmatprep.subr.mxu0 0.0
        %2182 = vmatpush1.msra.mxu0 %v2128
        %2183 = vmatprep.subr.mxu0 0.0
        %2184 = vmatpush1.msra.mxu0 %v2129
        %2185 = vmatprep.subr.mxu0 0.0
        %2186 = vmatpush1.msra.mxu0 %v2130
        %2187 = vmatprep.subr.mxu0 0.0
        %2188 = vmatpush1.msra.mxu0 %v2131
        %2189 = vmatprep.subr.mxu0 0.0
        %2190 = vmatpush1.msra.mxu0 %v2132
        %2191 = vmatprep.subr.mxu0 0.0
        %2192 = vmatpush1.msra.mxu0 %v2133
        %2193 = vmatprep.subr.mxu0 0.0
        %2194 = vmatpush1.msra.mxu0 %v2134
        %2195 = vmatprep.subr.mxu0 0.0
        %2196 = vmatpush1.msra.mxu0 %v2135
        %2197 = vmatprep.subr.mxu0 0.0
        %2198 = vmatpush1.msra.mxu0 %v2136
        %2199 = vmatprep.subr.mxu0 0.0
        %2200 = vmatpush1.msra.mxu0 %v2137
        %2201 = vmatprep.subr.mxu0 0.0
        %2202 = vmatpush1.msra.mxu0 %v2138
        %2203 = vmatprep.subr.mxu0 0.0
        %2204 = vmatpush1.msra.mxu0 %v2139
        %2205 = vmatprep.subr.mxu0 0.0
        %2206 = vmatpush1.msra.mxu0 %v2140
        %2207 = vmatprep.subr.mxu0 0.0
        %2208 = vmatpush1.msra.mxu0 %v2141
        %2209 = vmatprep.subr.mxu0 0.0
        %2210 = vmatpush1.msra.mxu0 %v2142
        %2211 = vmatprep.subr.mxu0 0.0
        %2212 = vmatpush1.msra.mxu0 %v2143
        %2213 = vmatprep.subr.mxu0 0.0
        %2214 = vmatpush1.msra.mxu0 %v2144
        %2215 = vmatprep.subr.mxu0 0.0
        %2216 = vmatpush1.msra.mxu0 %v2145
        %2217 = vmatprep.mubr.f32.mxu0 %v2113
        %2218 = vmatmul.mubr.f32.gmra.mrb[0].mxu0 %v2112
        %v2219 = vpop.f32.mrb[0].mxu0
        %v2220 = vadd.f32 %v2151, %v2219
        %v2221 = vpop.f32.mrb[0].mxu0
        %2222 = vdwg.mxu0
        %v2223 = vsub.f32 0.0, %v2220
        %v2224 = vmul.f32 %v2223, 1.442695
        %v2225 = vpow.pop %v2224
        %v2226 = vadd.f32 %v2225, 1.0
        %v2227 = vrcp.pop %v2226
        %vm2228 = vcmask 1024
        %2229 = vst.msk [vmem:[%s665] sm:$0x3] %vm2228, %v2227
        %p2230 = scmp.lt.s32.totalorder %s30, 2
        %s2231 = scalar_select %p2230, %s30, 2
        %s2232 = smul.addr %s2231, 2
        %s2233 = scalar_lea.vmem %s13, %s2232
        // Predicated region
        $region81: #{tpu_custom_call.1} parent=71 // pred_check
          %p2234 = pneg %p381
        $region82: #{tpu_custom_call.1} parent=71 // pred_check_branch
          %2236 = sbr.rel (%p2234) target = $region84
        $region83: #{tpu_custom_call.1} parent=71 // pred_region
          _
        $region84: #{tpu_custom_call.1} parent=71 // pred_fallthru
          _
      $region72: #{tpu_custom_call.1} parent=5 // pred_fallthru
        _
      %p2237 = scmp.le.s32.totalorder 2, %s25
      // Predicated region
      $region85: #{tpu_custom_call.1} parent=5 // pred_check
        %p2238 = pneg %p2237
      $region86: #{tpu_custom_call.1} parent=5 // pred_check_branch
        %2240 = sbr.rel (%p2238) target = $region88
      $region87: #{tpu_custom_call.1} parent=5 // pred_region
        %s2241 = ssub.s32 %s25, 2
        // Predicated region
        $region89: #{tpu_custom_call.1} parent=87 // pred_check
          %p2242 = pneg %p387
        $region90: #{tpu_custom_call.1} parent=87 // pred_check_branch
          %2244 = sbr.rel (%p2242) target = $region92
        $region91: #{tpu_custom_call.1} parent=87 // pred_region
          %p2245 = scmp.lt.s32.totalorder %s31, 2
          %s2246 = scalar_select %p2245, %s31, 2
          %s2247 = smul.addr %s2246, 2
          %s2248 = scalar_lea.vmem %s13, %s2247
        $region92: #{tpu_custom_call.1} parent=87 // pred_fallthru
          _
      $region88: #{tpu_custom_call.1} parent=5 // pred_fallthru
        _
    $region6: #{tpu_custom_call.1} parent=1 // loop_footer
      %s29 = sadd.s32 1, %s25
    $region7: #{tpu_custom_call.1} parent=1 // loop_footer_branch
      %24 = sbr.rel target = $region3
    $region8: #{tpu_custom_call.1} parent=1 // loop_exit
      _
    %2249 = vsyncpa [#allocation3], 1
    %s2250 = scalar_lea.sflag [#allocation3], 1
    %2251 = vsyncpa %s2250, 1
    %2252 = vsyncpa [#allocation5], 1
    %s2253 = scalar_lea.sflag [#allocation5], 1
    %2254 = vsyncpa %s2253, 1

</llo_original>
